<compile_context>
chip_gen: v6e
topology: v6e:2x2x1
jax: 0.10.0
libtpu: 0.0.40
codegen_flags: <defaults>
</compile_context>

<pallas_src>
import jax
import jax.numpy as jnp
from jax.experimental import pallas as pl
from jax.experimental.pallas import tpu as pltpu
import numpy as np


def model_kernel(x_ref, w1_ref, b1_ref, w2_ref, b2_ref, o_ref):
    # x_ref : (Cin, L)      L = R*WP, channel-major flattened padded rows
    # w1_ref: (Cout, Cin)   1x1 conv weight
    # b1_ref: (Cout, 1)     conv bias
    # w2_ref: (WP, Dout)    padded linear weight (rows >= Wp are zero)
    # b2_ref: (1, Dout)     linear bias
    # o_ref : (Cout, R*Dout)
    cin, l = x_ref.shape
    cout = o_ref.shape[0]
    wp, dout = w2_ref.shape
    n_rows = l // wp                       # R (static)

    x = x_ref[...]                         # (Cin, L)
    w1 = w1_ref[...]                       # (Cout, Cin)

    # Stage 1: 1x1 conv on the VPU -- Cin broadcast FMAs, + bias, ReLU.
    v1 = jnp.broadcast_to(b1_ref[...], (cout, l))
    for c in range(cin):                   # Cin = 3, unrolled at trace time
        v1 = v1 + w1[:, c:c + 1] * x[c:c + 1, :]
    v1 = jnp.maximum(v1, 0.0)              # (Cout, L)

    # Stage 2: per-row Linear(Wp -> Dout).  Each padded image row is one
    # 128-lane-aligned slice of v1; dot it against the tiny padded weight.
    w2 = w2_ref[...]                       # (WP, Dout)
    b2 = b2_ref[...]                       # (1, Dout)
    for r in range(n_rows):                # R = 16, unrolled at trace time
        chunk = v1[:, r * wp:(r + 1) * wp]                     # (Cout, WP)
        piece = jnp.dot(chunk, w2, preferred_element_type=jnp.float32) + b2
        o_ref[:, r * dout:(r + 1) * dout] = jnp.maximum(piece, 0.0)

    # TODO(synk): v2 = mean(v1, dim=(1,2,3)) in the torch forward is dead code
    # (never returned), so it is intentionally not computed here.


def model_forward(x, conv_w, conv_b, lin_w, lin_b):
    N, Cin, H, W = x.shape
    Hp, Wp = H + 2, W + 2
    Cout = conv_w.shape[0]
    Dout, Din = lin_w.shape
    assert Din == Wp, "Linear(100, 2) requires conv output width == 100"

    R = N * Hp                          # number of padded image rows
    WP = 128 * pl.cdiv(Wp, 128)         # lane-align padded width (100 -> 128)
    L = R * WP

    # Layout glue (fused by XLA under jit): conv zero-pad (1 row top/bottom,
    # 1 col left, 1 + lane-alignment cols right), channel-major, flatten rows.
    xp = jnp.pad(x.astype(jnp.float32),
                 ((0, 0), (0, 0), (1, 1), (1, WP - W - 1)))     # (N, Cin, Hp, WP)
    xr = jnp.transpose(xp, (1, 0, 2, 3)).reshape(Cin, L)        # (Cin, L)

    w1 = conv_w.reshape(Cout, Cin).astype(jnp.float32)          # (Cout, Cin)
    b1 = conv_b.reshape(Cout, 1).astype(jnp.float32)            # (Cout, 1)

    # Padded linear weight: columns [Wp, WP) get weight 0 so the alignment
    # padding of v1 never contributes.
    w2 = jnp.zeros((WP, Dout), jnp.float32).at[:Wp, :].set(
        lin_w.T.astype(jnp.float32))                            # (WP, Dout)
    b2 = lin_b.reshape(1, Dout).astype(jnp.float32)             # (1, Dout)

    out = pl.pallas_call(
        model_kernel,
        out_shape=jax.ShapeDtypeStruct((Cout, R * Dout), jnp.float32),
        in_specs=[pl.BlockSpec(memory_space=pltpu.MemorySpace.VMEM)] * 5,
        out_specs=pl.BlockSpec(memory_space=pltpu.MemorySpace.VMEM),
    )(xr, w1, b1, w2, b2)

    # (Cout, R*Dout) -> (N, Cout, Hp, Dout): torch-style NCHW output.
    return out.reshape(Cout, N, Hp, Dout).transpose(1, 0, 2, 3)


def reference_forward(x, conv_w, conv_b, lin_w, lin_b):
    # pure-JAX reference of the torch semantics
    xp = jnp.pad(x, ((0, 0), (0, 0), (1, 1), (1, 1)))
    w1 = conv_w.reshape(conv_w.shape[0], conv_w.shape[1])
    v1 = jnp.einsum('nchw,oc->nohw', xp, w1) + conv_b[None, :, None, None]
    v1 = jnp.maximum(v1, 0.0)
    v3 = jnp.einsum('nohw,dw->nohd', v1, lin_w) + lin_b[None, None, None, :]
    return jnp.maximum(v3, 0.0)


if __name__ == "__main__":
    key = jax.random.PRNGKey(0)
    k1, k2, k3, k4, k5 = jax.random.split(key, 5)

    # Small shapes consistent with the module: Linear(100, 2) over the width
    # axis forces conv output width = 100, i.e. input width = 98.
    N, Cin, H, W = 2, 3, 6, 98
    Cout, Din, Dout = 8, 100, 2

    x = jax.random.normal(k1, (N, Cin, H, W), dtype=jnp.float32)
    conv_w = jax.random.normal(k2, (Cout, Cin, 1, 1), dtype=jnp.float32) * 0.2
    conv_b = jax.random.normal(k3, (Cout,), dtype=jnp.float32) * 0.1
    lin_w = jax.random.normal(k4, (Dout, Din), dtype=jnp.float32) * 0.1
    lin_b = jax.random.normal(k5, (Dout,), dtype=jnp.float32) * 0.1

    fwd = jax.jit(model_forward)
    out = jax.block_until_ready(fwd(x, conv_w, conv_b, lin_w, lin_b))

    ref = jax.block_until_ready(reference_forward(x, conv_w, conv_b, lin_w, lin_b))
    assert out.shape == (N, Cout, H + 2, Dout), out.shape
    np.testing.assert_allclose(np.asarray(out), np.asarray(ref), rtol=1e-5, atol=1e-5)

    print("KERNEL_OK")
</pallas_src>

<mosaic_0001>
module attributes {stable_mosaic.version = 11 : i64} {
  func.func @model_kernel(%arg0: memref<3x2048xf32, #tpu.memory_space<vmem>>, %arg1: memref<8x3xf32, #tpu.memory_space<vmem>>, %arg2: memref<8x1xf32, #tpu.memory_space<vmem>>, %arg3: memref<128x2xf32, #tpu.memory_space<vmem>>, %arg4: memref<1x2xf32, #tpu.memory_space<vmem>>, %arg5: memref<8x32xf32, #tpu.memory_space<vmem>>) attributes {dimension_semantics = [], scalar_prefetch = 0 : i64, scratch_operands = 0 : i64, tpu.core_type = #tpu.core_type<tc>} {
    %c0 = arith.constant 0 : index
    %c0_0 = arith.constant 0 : index
    %0 = vector.load %arg0[%c0, %c0_0] : memref<3x2048xf32, #tpu.memory_space<vmem>>, vector<3x2048xf32>
    %c0_1 = arith.constant 0 : index
    %c0_2 = arith.constant 0 : index
    %1 = vector.load %arg1[%c0_1, %c0_2] : memref<8x3xf32, #tpu.memory_space<vmem>>, vector<8x3xf32>
    %c0_3 = arith.constant 0 : index
    %c0_4 = arith.constant 0 : index
    %2 = vector.load %arg2[%c0_3, %c0_4] : memref<8x1xf32, #tpu.memory_space<vmem>>, vector<8x1xf32>
    %3 = vector.shape_cast %2 : vector<8x1xf32> to vector<8x1xf32>
    %4 = vector.broadcast %3 : vector<8x1xf32> to vector<8x2048xf32>
    %5 = vector.extract_strided_slice %1 {offsets = [0, 0], sizes = [8, 1], strides = [1, 1]} : vector<8x3xf32> to vector<8x1xf32>
    %6 = vector.extract_strided_slice %0 {offsets = [0, 0], sizes = [1, 2048], strides = [1, 1]} : vector<3x2048xf32> to vector<1x2048xf32>
    %7 = vector.broadcast %5 : vector<8x1xf32> to vector<8x2048xf32>
    %8 = vector.broadcast %6 : vector<1x2048xf32> to vector<8x2048xf32>
    %9 = arith.mulf %7, %8 : vector<8x2048xf32>
    %10 = arith.addf %4, %9 : vector<8x2048xf32>
    %11 = vector.extract_strided_slice %1 {offsets = [0, 1], sizes = [8, 1], strides = [1, 1]} : vector<8x3xf32> to vector<8x1xf32>
    %12 = vector.extract_strided_slice %0 {offsets = [1, 0], sizes = [1, 2048], strides = [1, 1]} : vector<3x2048xf32> to vector<1x2048xf32>
    %13 = vector.broadcast %11 : vector<8x1xf32> to vector<8x2048xf32>
    %14 = vector.broadcast %12 : vector<1x2048xf32> to vector<8x2048xf32>
    %15 = arith.mulf %13, %14 : vector<8x2048xf32>
    %16 = arith.addf %10, %15 : vector<8x2048xf32>
    %17 = vector.extract_strided_slice %1 {offsets = [0, 2], sizes = [8, 1], strides = [1, 1]} : vector<8x3xf32> to vector<8x1xf32>
    %18 = vector.extract_strided_slice %0 {offsets = [2, 0], sizes = [1, 2048], strides = [1, 1]} : vector<3x2048xf32> to vector<1x2048xf32>
    %19 = vector.broadcast %17 : vector<8x1xf32> to vector<8x2048xf32>
    %20 = vector.broadcast %18 : vector<1x2048xf32> to vector<8x2048xf32>
    %21 = arith.mulf %19, %20 : vector<8x2048xf32>
    %22 = arith.addf %16, %21 : vector<8x2048xf32>
    %cst = arith.constant 0.000000e+00 : f32
    %23 = vector.broadcast %cst : f32 to vector<8x2048xf32>
    %24 = arith.maximumf %22, %23 : vector<8x2048xf32>
    %c0_5 = arith.constant 0 : index
    %c0_6 = arith.constant 0 : index
    %25 = vector.load %arg3[%c0_5, %c0_6] : memref<128x2xf32, #tpu.memory_space<vmem>>, vector<128x2xf32>
    %c0_7 = arith.constant 0 : index
    %c0_8 = arith.constant 0 : index
    %26 = vector.load %arg4[%c0_7, %c0_8] : memref<1x2xf32, #tpu.memory_space<vmem>>, vector<1x2xf32>
    %27 = vector.extract_strided_slice %24 {offsets = [0, 0], sizes = [8, 128], strides = [1, 1]} : vector<8x2048xf32> to vector<8x128xf32>
    %cst_9 = arith.constant dense<0.000000e+00> : vector<8x2xf32>
    %28 = tpu.matmul %27, %25, %cst_9 {dimension_numbers = #tpu.dot_dimension_numbers<[1], [0], [0], [1], [0, 0, 1, 1], [], []>} : vector<8x128xf32>, vector<128x2xf32>, vector<8x2xf32> -> vector<8x2xf32>
    %29 = vector.broadcast %26 : vector<1x2xf32> to vector<8x2xf32>
    %30 = arith.addf %28, %29 : vector<8x2xf32>
    %cst_10 = arith.constant 0.000000e+00 : f32
    %31 = vector.broadcast %cst_10 : f32 to vector<8x2xf32>
    %32 = arith.maximumf %30, %31 : vector<8x2xf32>
    %c0_11 = arith.constant 0 : index
    %c0_12 = arith.constant 0 : index
    %33 = vector.load %arg5[%c0_11, %c0_12] : memref<8x32xf32, #tpu.memory_space<vmem>>, vector<8x2xf32>
    tpu.vector_store %arg5[%c0_11, %c0_12], %32 {strides = array<i32>} : memref<8x32xf32, #tpu.memory_space<vmem>>, vector<8x2xf32>,
    %34 = vector.extract_strided_slice %24 {offsets = [0, 128], sizes = [8, 128], strides = [1, 1]} : vector<8x2048xf32> to vector<8x128xf32>
    %cst_13 = arith.constant dense<0.000000e+00> : vector<8x2xf32>
    %35 = tpu.matmul %34, %25, %cst_13 {dimension_numbers = #tpu.dot_dimension_numbers<[1], [0], [0], [1], [0, 0, 1, 1], [], []>} : vector<8x128xf32>, vector<128x2xf32>, vector<8x2xf32> -> vector<8x2xf32>
    %36 = vector.broadcast %26 : vector<1x2xf32> to vector<8x2xf32>
    %37 = arith.addf %35, %36 : vector<8x2xf32>
    %cst_14 = arith.constant 0.000000e+00 : f32
    %38 = vector.broadcast %cst_14 : f32 to vector<8x2xf32>
    %39 = arith.maximumf %37, %38 : vector<8x2xf32>
    %c0_15 = arith.constant 0 : index
    %c2 = arith.constant 2 : index
    %40 = vector.load %arg5[%c0_15, %c2] : memref<8x32xf32, #tpu.memory_space<vmem>>, vector<8x2xf32>
    tpu.vector_store %arg5[%c0_15, %c2], %39 {strides = array<i32>} : memref<8x32xf32, #tpu.memory_space<vmem>>, vector<8x2xf32>,
    %41 = vector.extract_strided_slice %24 {offsets = [0, 256], sizes = [8, 128], strides = [1, 1]} : vector<8x2048xf32> to vector<8x128xf32>
    %cst_16 = arith.constant dense<0.000000e+00> : vector<8x2xf32>
    %42 = tpu.matmul %41, %25, %cst_16 {dimension_numbers = #tpu.dot_dimension_numbers<[1], [0], [0], [1], [0, 0, 1, 1], [], []>} : vector<8x128xf32>, vector<128x2xf32>, vector<8x2xf32> -> vector<8x2xf32>
    %43 = vector.broadcast %26 : vector<1x2xf32> to vector<8x2xf32>
    %44 = arith.addf %42, %43 : vector<8x2xf32>
    %cst_17 = arith.constant 0.000000e+00 : f32
    %45 = vector.broadcast %cst_17 : f32 to vector<8x2xf32>
    %46 = arith.maximumf %44, %45 : vector<8x2xf32>
    %c0_18 = arith.constant 0 : index
    %c4 = arith.constant 4 : index
    %47 = vector.load %arg5[%c0_18, %c4] : memref<8x32xf32, #tpu.memory_space<vmem>>, vector<8x2xf32>
    tpu.vector_store %arg5[%c0_18, %c4], %46 {strides = array<i32>} : memref<8x32xf32, #tpu.memory_space<vmem>>, vector<8x2xf32>,
    %48 = vector.extract_strided_slice %24 {offsets = [0, 384], sizes = [8, 128], strides = [1, 1]} : vector<8x2048xf32> to vector<8x128xf32>
    %cst_19 = arith.constant dense<0.000000e+00> : vector<8x2xf32>
    %49 = tpu.matmul %48, %25, %cst_19 {dimension_numbers = #tpu.dot_dimension_numbers<[1], [0], [0], [1], [0, 0, 1, 1], [], []>} : vector<8x128xf32>, vector<128x2xf32>, vector<8x2xf32> -> vector<8x2xf32>
    %50 = vector.broadcast %26 : vector<1x2xf32> to vector<8x2xf32>
    %51 = arith.addf %49, %50 : vector<8x2xf32>
    %cst_20 = arith.constant 0.000000e+00 : f32
    %52 = vector.broadcast %cst_20 : f32 to vector<8x2xf32>
    %53 = arith.maximumf %51, %52 : vector<8x2xf32>
    %c0_21 = arith.constant 0 : index
    %c6 = arith.constant 6 : index
    %54 = vector.load %arg5[%c0_21, %c6] : memref<8x32xf32, #tpu.memory_space<vmem>>, vector<8x2xf32>
    tpu.vector_store %arg5[%c0_21, %c6], %53 {strides = array<i32>} : memref<8x32xf32, #tpu.memory_space<vmem>>, vector<8x2xf32>,
    %55 = vector.extract_strided_slice %24 {offsets = [0, 512], sizes = [8, 128], strides = [1, 1]} : vector<8x2048xf32> to vector<8x128xf32>
    %cst_22 = arith.constant dense<0.000000e+00> : vector<8x2xf32>
    %56 = tpu.matmul %55, %25, %cst_22 {dimension_numbers = #tpu.dot_dimension_numbers<[1], [0], [0], [1], [0, 0, 1, 1], [], []>} : vector<8x128xf32>, vector<128x2xf32>, vector<8x2xf32> -> vector<8x2xf32>
    %57 = vector.broadcast %26 : vector<1x2xf32> to vector<8x2xf32>
    %58 = arith.addf %56, %57 : vector<8x2xf32>
    %cst_23 = arith.constant 0.000000e+00 : f32
    %59 = vector.broadcast %cst_23 : f32 to vector<8x2xf32>
    %60 = arith.maximumf %58, %59 : vector<8x2xf32>
    %c0_24 = arith.constant 0 : index
    %c8 = arith.constant 8 : index
    %61 = vector.load %arg5[%c0_24, %c8] : memref<8x32xf32, #tpu.memory_space<vmem>>, vector<8x2xf32>
    tpu.vector_store %arg5[%c0_24, %c8], %60 {strides = array<i32>} : memref<8x32xf32, #tpu.memory_space<vmem>>, vector<8x2xf32>,
    %62 = vector.extract_strided_slice %24 {offsets = [0, 640], sizes = [8, 128], strides = [1, 1]} : vector<8x2048xf32> to vector<8x128xf32>
    %cst_25 = arith.constant dense<0.000000e+00> : vector<8x2xf32>
    %63 = tpu.matmul %62, %25, %cst_25 {dimension_numbers = #tpu.dot_dimension_numbers<[1], [0], [0], [1], [0, 0, 1, 1], [], []>} : vector<8x128xf32>, vector<128x2xf32>, vector<8x2xf32> -> vector<8x2xf32>
    %64 = vector.broadcast %26 : vector<1x2xf32> to vector<8x2xf32>
    %65 = arith.addf %63, %64 : vector<8x2xf32>
    %cst_26 = arith.constant 0.000000e+00 : f32
    %66 = vector.broadcast %cst_26 : f32 to vector<8x2xf32>
    %67 = arith.maximumf %65, %66 : vector<8x2xf32>
    %c0_27 = arith.constant 0 : index
    %c10 = arith.constant 10 : index
    %68 = vector.load %arg5[%c0_27, %c10] : memref<8x32xf32, #tpu.memory_space<vmem>>, vector<8x2xf32>
    tpu.vector_store %arg5[%c0_27, %c10], %67 {strides = array<i32>} : memref<8x32xf32, #tpu.memory_space<vmem>>, vector<8x2xf32>,
    %69 = vector.extract_strided_slice %24 {offsets = [0, 768], sizes = [8, 128], strides = [1, 1]} : vector<8x2048xf32> to vector<8x128xf32>
    %cst_28 = arith.constant dense<0.000000e+00> : vector<8x2xf32>
    %70 = tpu.matmul %69, %25, %cst_28 {dimension_numbers = #tpu.dot_dimension_numbers<[1], [0], [0], [1], [0, 0, 1, 1], [], []>} : vector<8x128xf32>, vector<128x2xf32>, vector<8x2xf32> -> vector<8x2xf32>
    %71 = vector.broadcast %26 : vector<1x2xf32> to vector<8x2xf32>
    %72 = arith.addf %70, %71 : vector<8x2xf32>
    %cst_29 = arith.constant 0.000000e+00 : f32
    %73 = vector.broadcast %cst_29 : f32 to vector<8x2xf32>
    %74 = arith.maximumf %72, %73 : vector<8x2xf32>
    %c0_30 = arith.constant 0 : index
    %c12 = arith.constant 12 : index
    %75 = vector.load %arg5[%c0_30, %c12] : memref<8x32xf32, #tpu.memory_space<vmem>>, vector<8x2xf32>
    tpu.vector_store %arg5[%c0_30, %c12], %74 {strides = array<i32>} : memref<8x32xf32, #tpu.memory_space<vmem>>, vector<8x2xf32>,
    %76 = vector.extract_strided_slice %24 {offsets = [0, 896], sizes = [8, 128], strides = [1, 1]} : vector<8x2048xf32> to vector<8x128xf32>
    %cst_31 = arith.constant dense<0.000000e+00> : vector<8x2xf32>
    %77 = tpu.matmul %76, %25, %cst_31 {dimension_numbers = #tpu.dot_dimension_numbers<[1], [0], [0], [1], [0, 0, 1, 1], [], []>} : vector<8x128xf32>, vector<128x2xf32>, vector<8x2xf32> -> vector<8x2xf32>
    %78 = vector.broadcast %26 : vector<1x2xf32> to vector<8x2xf32>
    %79 = arith.addf %77, %78 : vector<8x2xf32>
    %cst_32 = arith.constant 0.000000e+00 : f32
    %80 = vector.broadcast %cst_32 : f32 to vector<8x2xf32>
    %81 = arith.maximumf %79, %80 : vector<8x2xf32>
    %c0_33 = arith.constant 0 : index
    %c14 = arith.constant 14 : index
    %82 = vector.load %arg5[%c0_33, %c14] : memref<8x32xf32, #tpu.memory_space<vmem>>, vector<8x2xf32>
    tpu.vector_store %arg5[%c0_33, %c14], %81 {strides = array<i32>} : memref<8x32xf32, #tpu.memory_space<vmem>>, vector<8x2xf32>,
    %83 = vector.extract_strided_slice %24 {offsets = [0, 1024], sizes = [8, 128], strides = [1, 1]} : vector<8x2048xf32> to vector<8x128xf32>
    %cst_34 = arith.constant dense<0.000000e+00> : vector<8x2xf32>
    %84 = tpu.matmul %83, %25, %cst_34 {dimension_numbers = #tpu.dot_dimension_numbers<[1], [0], [0], [1], [0, 0, 1, 1], [], []>} : vector<8x128xf32>, vector<128x2xf32>, vector<8x2xf32> -> vector<8x2xf32>
    %85 = vector.broadcast %26 : vector<1x2xf32> to vector<8x2xf32>
    %86 = arith.addf %84, %85 : vector<8x2xf32>
    %cst_35 = arith.constant 0.000000e+00 : f32
    %87 = vector.broadcast %cst_35 : f32 to vector<8x2xf32>
    %88 = arith.maximumf %86, %87 : vector<8x2xf32>
    %c0_36 = arith.constant 0 : index
    %c16 = arith.constant 16 : index
    %89 = vector.load %arg5[%c0_36, %c16] : memref<8x32xf32, #tpu.memory_space<vmem>>, vector<8x2xf32>
    tpu.vector_store %arg5[%c0_36, %c16], %88 {strides = array<i32>} : memref<8x32xf32, #tpu.memory_space<vmem>>, vector<8x2xf32>,
    %90 = vector.extract_strided_slice %24 {offsets = [0, 1152], sizes = [8, 128], strides = [1, 1]} : vector<8x2048xf32> to vector<8x128xf32>
    %cst_37 = arith.constant dense<0.000000e+00> : vector<8x2xf32>
    %91 = tpu.matmul %90, %25, %cst_37 {dimension_numbers = #tpu.dot_dimension_numbers<[1], [0], [0], [1], [0, 0, 1, 1], [], []>} : vector<8x128xf32>, vector<128x2xf32>, vector<8x2xf32> -> vector<8x2xf32>
    %92 = vector.broadcast %26 : vector<1x2xf32> to vector<8x2xf32>
    %93 = arith.addf %91, %92 : vector<8x2xf32>
    %cst_38 = arith.constant 0.000000e+00 : f32
    %94 = vector.broadcast %cst_38 : f32 to vector<8x2xf32>
    %95 = arith.maximumf %93, %94 : vector<8x2xf32>
    %c0_39 = arith.constant 0 : index
    %c18 = arith.constant 18 : index
    %96 = vector.load %arg5[%c0_39, %c18] : memref<8x32xf32, #tpu.memory_space<vmem>>, vector<8x2xf32>
    tpu.vector_store %arg5[%c0_39, %c18], %95 {strides = array<i32>} : memref<8x32xf32, #tpu.memory_space<vmem>>, vector<8x2xf32>,
    %97 = vector.extract_strided_slice %24 {offsets = [0, 1280], sizes = [8, 128], strides = [1, 1]} : vector<8x2048xf32> to vector<8x128xf32>
    %cst_40 = arith.constant dense<0.000000e+00> : vector<8x2xf32>
    %98 = tpu.matmul %97, %25, %cst_40 {dimension_numbers = #tpu.dot_dimension_numbers<[1], [0], [0], [1], [0, 0, 1, 1], [], []>} : vector<8x128xf32>, vector<128x2xf32>, vector<8x2xf32> -> vector<8x2xf32>
    %99 = vector.broadcast %26 : vector<1x2xf32> to vector<8x2xf32>
    %100 = arith.addf %98, %99 : vector<8x2xf32>
    %cst_41 = arith.constant 0.000000e+00 : f32
    %101 = vector.broadcast %cst_41 : f32 to vector<8x2xf32>
    %102 = arith.maximumf %100, %101 : vector<8x2xf32>
    %c0_42 = arith.constant 0 : index
    %c20 = arith.constant 20 : index
    %103 = vector.load %arg5[%c0_42, %c20] : memref<8x32xf32, #tpu.memory_space<vmem>>, vector<8x2xf32>
    tpu.vector_store %arg5[%c0_42, %c20], %102 {strides = array<i32>} : memref<8x32xf32, #tpu.memory_space<vmem>>, vector<8x2xf32>,
    %104 = vector.extract_strided_slice %24 {offsets = [0, 1408], sizes = [8, 128], strides = [1, 1]} : vector<8x2048xf32> to vector<8x128xf32>
    %cst_43 = arith.constant dense<0.000000e+00> : vector<8x2xf32>
    %105 = tpu.matmul %104, %25, %cst_43 {dimension_numbers = #tpu.dot_dimension_numbers<[1], [0], [0], [1], [0, 0, 1, 1], [], []>} : vector<8x128xf32>, vector<128x2xf32>, vector<8x2xf32> -> vector<8x2xf32>
    %106 = vector.broadcast %26 : vector<1x2xf32> to vector<8x2xf32>
    %107 = arith.addf %105, %106 : vector<8x2xf32>
    %cst_44 = arith.constant 0.000000e+00 : f32
    %108 = vector.broadcast %cst_44 : f32 to vector<8x2xf32>
    %109 = arith.maximumf %107, %108 : vector<8x2xf32>
    %c0_45 = arith.constant 0 : index
    %c22 = arith.constant 22 : index
    %110 = vector.load %arg5[%c0_45, %c22] : memref<8x32xf32, #tpu.memory_space<vmem>>, vector<8x2xf32>
    tpu.vector_store %arg5[%c0_45, %c22], %109 {strides = array<i32>} : memref<8x32xf32, #tpu.memory_space<vmem>>, vector<8x2xf32>,
    %111 = vector.extract_strided_slice %24 {offsets = [0, 1536], sizes = [8, 128], strides = [1, 1]} : vector<8x2048xf32> to vector<8x128xf32>
    %cst_46 = arith.constant dense<0.000000e+00> : vector<8x2xf32>
    %112 = tpu.matmul %111, %25, %cst_46 {dimension_numbers = #tpu.dot_dimension_numbers<[1], [0], [0], [1], [0, 0, 1, 1], [], []>} : vector<8x128xf32>, vector<128x2xf32>, vector<8x2xf32> -> vector<8x2xf32>
    %113 = vector.broadcast %26 : vector<1x2xf32> to vector<8x2xf32>
    %114 = arith.addf %112, %113 : vector<8x2xf32>
    %cst_47 = arith.constant 0.000000e+00 : f32
    %115 = vector.broadcast %cst_47 : f32 to vector<8x2xf32>
    %116 = arith.maximumf %114, %115 : vector<8x2xf32>
    %c0_48 = arith.constant 0 : index
    %c24 = arith.constant 24 : index
    %117 = vector.load %arg5[%c0_48, %c24] : memref<8x32xf32, #tpu.memory_space<vmem>>, vector<8x2xf32>
    tpu.vector_store %arg5[%c0_48, %c24], %116 {strides = array<i32>} : memref<8x32xf32, #tpu.memory_space<vmem>>, vector<8x2xf32>,
    %118 = vector.extract_strided_slice %24 {offsets = [0, 1664], sizes = [8, 128], strides = [1, 1]} : vector<8x2048xf32> to vector<8x128xf32>
    %cst_49 = arith.constant dense<0.000000e+00> : vector<8x2xf32>
    %119 = tpu.matmul %118, %25, %cst_49 {dimension_numbers = #tpu.dot_dimension_numbers<[1], [0], [0], [1], [0, 0, 1, 1], [], []>} : vector<8x128xf32>, vector<128x2xf32>, vector<8x2xf32> -> vector<8x2xf32>
    %120 = vector.broadcast %26 : vector<1x2xf32> to vector<8x2xf32>
    %121 = arith.addf %119, %120 : vector<8x2xf32>
    %cst_50 = arith.constant 0.000000e+00 : f32
    %122 = vector.broadcast %cst_50 : f32 to vector<8x2xf32>
    %123 = arith.maximumf %121, %122 : vector<8x2xf32>
    %c0_51 = arith.constant 0 : index
    %c26 = arith.constant 26 : index
    %124 = vector.load %arg5[%c0_51, %c26] : memref<8x32xf32, #tpu.memory_space<vmem>>, vector<8x2xf32>
    tpu.vector_store %arg5[%c0_51, %c26], %123 {strides = array<i32>} : memref<8x32xf32, #tpu.memory_space<vmem>>, vector<8x2xf32>,
    %125 = vector.extract_strided_slice %24 {offsets = [0, 1792], sizes = [8, 128], strides = [1, 1]} : vector<8x2048xf32> to vector<8x128xf32>
    %cst_52 = arith.constant dense<0.000000e+00> : vector<8x2xf32>
    %126 = tpu.matmul %125, %25, %cst_52 {dimension_numbers = #tpu.dot_dimension_numbers<[1], [0], [0], [1], [0, 0, 1, 1], [], []>} : vector<8x128xf32>, vector<128x2xf32>, vector<8x2xf32> -> vector<8x2xf32>
    %127 = vector.broadcast %26 : vector<1x2xf32> to vector<8x2xf32>
    %128 = arith.addf %126, %127 : vector<8x2xf32>
    %cst_53 = arith.constant 0.000000e+00 : f32
    %129 = vector.broadcast %cst_53 : f32 to vector<8x2xf32>
    %130 = arith.maximumf %128, %129 : vector<8x2xf32>
    %c0_54 = arith.constant 0 : index
    %c28 = arith.constant 28 : index
    %131 = vector.load %arg5[%c0_54, %c28] : memref<8x32xf32, #tpu.memory_space<vmem>>, vector<8x2xf32>
    tpu.vector_store %arg5[%c0_54, %c28], %130 {strides = array<i32>} : memref<8x32xf32, #tpu.memory_space<vmem>>, vector<8x2xf32>,
    %132 = vector.extract_strided_slice %24 {offsets = [0, 1920], sizes = [8, 128], strides = [1, 1]} : vector<8x2048xf32> to vector<8x128xf32>
    %cst_55 = arith.constant dense<0.000000e+00> : vector<8x2xf32>
    %133 = tpu.matmul %132, %25, %cst_55 {dimension_numbers = #tpu.dot_dimension_numbers<[1], [0], [0], [1], [0, 0, 1, 1], [], []>} : vector<8x128xf32>, vector<128x2xf32>, vector<8x2xf32> -> vector<8x2xf32>
    %134 = vector.broadcast %26 : vector<1x2xf32> to vector<8x2xf32>
    %135 = arith.addf %133, %134 : vector<8x2xf32>
    %cst_56 = arith.constant 0.000000e+00 : f32
    %136 = vector.broadcast %cst_56 : f32 to vector<8x2xf32>
    %137 = arith.maximumf %135, %136 : vector<8x2xf32>
    %c0_57 = arith.constant 0 : index
    %c30 = arith.constant 30 : index
    %138 = vector.load %arg5[%c0_57, %c30] : memref<8x32xf32, #tpu.memory_space<vmem>>, vector<8x2xf32>
    tpu.vector_store %arg5[%c0_57, %c30], %137 {strides = array<i32>} : memref<8x32xf32, #tpu.memory_space<vmem>>, vector<8x2xf32>,
    return
  }
}

</mosaic_0001>

<llo_original>
// kernel: model_forward.1
$region0: #{model_forward.1}
  #allocation0 [shape = 'u32[]', space=smem, size = 0x4, offset = 0x4, fixed_abs, tag = 'smem constant byte address 0x4 - core index']
  #allocation1 [shape = 'u32[144,128]{1,0:T(1,128)}', space=vmem, size = 0x12000, scoped, tag = 'internal scratch']
  %s0 = inlined_call_operand.vmem [shape: f32[3,2048], index: 0, kind: input, shape index: {}]
  %s1 = inlined_call_operand.vmem [shape: f32[8,3], index: 1, kind: input, shape index: {}]
  %s2 = inlined_call_operand.vmem [shape: f32[8,1], index: 2, kind: input, shape index: {}]
  %s3 = inlined_call_operand.vmem [shape: f32[128,2], index: 3, kind: input, shape index: {}]
  %s4 = inlined_call_operand.vmem [shape: f32[1,2], index: 4, kind: input, shape index: {}]
  %s5 = inlined_call_operand.vmem [shape: f32[8,32], index: 5, kind: output, shape index: {}]
  %s6 = sld [smem:[#allocation0]]
  $region30: #{model_forward.1} parent=0
    _
  %s8 = ssub.s32 1, %s6
  %s9 = scalar_select 0, %s8, %s6
  // Predicated region
  $region2: #{model_forward.1} parent=0 // pred_check
    _
  $region3: #{model_forward.1} parent=0 // pred_check_branch
    %11 = sbr.rel (0) target = $region5
  $region4: #{model_forward.1} parent=0 // pred_region
    _
  $region5: #{model_forward.1} parent=0 // pred_fallthru
    _
  // Predicated region
  $region6: #{model_forward.1} parent=0 // pred_check
    _
  $region7: #{model_forward.1} parent=0 // pred_check_branch
    %13 = sbr.rel (0) target = $region9
  $region8: #{model_forward.1} parent=0 // pred_region
    _
  $region9: #{model_forward.1} parent=0 // pred_fallthru
    _
  // Predicated region
  $region10: #{model_forward.1} parent=0 // pred_check
    _
  $region11: #{model_forward.1} parent=0 // pred_check_branch
    %15 = sbr.rel (0) target = $region13
  $region12: #{model_forward.1} parent=0 // pred_region
    _
  $region13: #{model_forward.1} parent=0 // pred_fallthru
    _
  // Predicated region
  $region14: #{model_forward.1} parent=0 // pred_check
    _
  $region15: #{model_forward.1} parent=0 // pred_check_branch
    %17 = sbr.rel (0) target = $region17
  $region16: #{model_forward.1} parent=0 // pred_region
    _
  $region17: #{model_forward.1} parent=0 // pred_fallthru
    _
  // Predicated region
  $region18: #{model_forward.1} parent=0 // pred_check
    _
  $region19: #{model_forward.1} parent=0 // pred_check_branch
    %19 = sbr.rel (0) target = $region21
  $region20: #{model_forward.1} parent=0 // pred_region
    _
  $region21: #{model_forward.1} parent=0 // pred_fallthru
    _
  %v20 = vld [vmem:[%s0] sm:$0x77]
  %v21 = vld [vmem:[%s0 + $0x8] sm:$0x77]
  %v22 = vld [vmem:[%s0 + $0x10] sm:$0x77]
  %v23 = vld [vmem:[%s0 + $0x18] sm:$0x77]
  %v24 = vld [vmem:[%s0 + $0x20] sm:$0x77]
  %v25 = vld [vmem:[%s0 + $0x28] sm:$0x77]
  %v26 = vld [vmem:[%s0 + $0x30] sm:$0x77]
  %v27 = vld [vmem:[%s0 + $0x38] sm:$0x77]
  %v28 = vld [vmem:[%s1] sm:$0xff]
  %v29 = vld [vmem:[%s2] sm:$0xff]
  %31 = vset.pattern.permute.xlu0 0
  %32 = vperm.xlu0 %31, %v29
  %v33 = vpop.permute.xlu0 %32
  %36 = vset.pattern.permute.xlu0 0
  %37 = vperm.xlu0 %36, %v28
  %v38 = vpop.permute.xlu0 %37
  %v48 = vlaneseq
  %v49 = vshrl.u32 %v48, 7
  %v50 = vsub.s32 0, %v49
  %v51 = vrot.slane %v20, %v50
  %v52 = vlaneseq
  %v53 = vshrl.u32 %v52, 7
  %v54 = vsub.s32 4, %v53
  %v55 = vrot.slane %v20, %v54
  %v56 = vlaneseq
  %v57 = vshrl.u32 %v56, 7
  %v58 = vsub.s32 0, %v57
  %v59 = vrot.slane %v21, %v58
  %v60 = vlaneseq
  %v61 = vshrl.u32 %v60, 7
  %v62 = vsub.s32 4, %v61
  %v63 = vrot.slane %v21, %v62
  %v64 = vlaneseq
  %v65 = vshrl.u32 %v64, 7
  %v66 = vsub.s32 0, %v65
  %v67 = vrot.slane %v22, %v66
  %v68 = vlaneseq
  %v69 = vshrl.u32 %v68, 7
  %v70 = vsub.s32 4, %v69
  %v71 = vrot.slane %v22, %v70
  %v72 = vlaneseq
  %v73 = vshrl.u32 %v72, 7
  %v74 = vsub.s32 0, %v73
  %v75 = vrot.slane %v23, %v74
  %v76 = vlaneseq
  %v77 = vshrl.u32 %v76, 7
  %v78 = vsub.s32 4, %v77
  %v79 = vrot.slane %v23, %v78
  %v80 = vlaneseq
  %v81 = vshrl.u32 %v80, 7
  %v82 = vsub.s32 0, %v81
  %v83 = vrot.slane %v24, %v82
  %v84 = vlaneseq
  %v85 = vshrl.u32 %v84, 7
  %v86 = vsub.s32 4, %v85
  %v87 = vrot.slane %v24, %v86
  %v88 = vlaneseq
  %v89 = vshrl.u32 %v88, 7
  %v90 = vsub.s32 0, %v89
  %v91 = vrot.slane %v25, %v90
  %v92 = vlaneseq
  %v93 = vshrl.u32 %v92, 7
  %v94 = vsub.s32 4, %v93
  %v95 = vrot.slane %v25, %v94
  %v96 = vlaneseq
  %v97 = vshrl.u32 %v96, 7
  %v98 = vsub.s32 0, %v97
  %v99 = vrot.slane %v26, %v98
  %v100 = vlaneseq
  %v101 = vshrl.u32 %v100, 7
  %v102 = vsub.s32 4, %v101
  %v103 = vrot.slane %v26, %v102
  %v104 = vlaneseq
  %v105 = vshrl.u32 %v104, 7
  %v106 = vsub.s32 0, %v105
  %v107 = vrot.slane %v27, %v106
  %v108 = vlaneseq
  %v109 = vshrl.u32 %v108, 7
  %v110 = vsub.s32 4, %v109
  %v111 = vrot.slane %v27, %v110
  %v128 = vlaneseq
  %v129 = vshrl.u32 %v128, 7
  %v130 = vsub.s32 0, %v129
  %v131 = vrot.slane %v51, %v130
  %v132 = vlaneseq
  %v133 = vshrl.u32 %v132, 7
  %v134 = vsub.s32 0, %v133
  %v135 = vrot.slane %v55, %v134
  %v136 = vlaneseq
  %v137 = vshrl.u32 %v136, 7
  %v138 = vsub.s32 0, %v137
  %v139 = vrot.slane %v59, %v138
  %v140 = vlaneseq
  %v141 = vshrl.u32 %v140, 7
  %v142 = vsub.s32 0, %v141
  %v143 = vrot.slane %v63, %v142
  %v144 = vlaneseq
  %v145 = vshrl.u32 %v144, 7
  %v146 = vsub.s32 0, %v145
  %v147 = vrot.slane %v67, %v146
  %v148 = vlaneseq
  %v149 = vshrl.u32 %v148, 7
  %v150 = vsub.s32 0, %v149
  %v151 = vrot.slane %v71, %v150
  %v152 = vlaneseq
  %v153 = vshrl.u32 %v152, 7
  %v154 = vsub.s32 0, %v153
  %v155 = vrot.slane %v75, %v154
  %v156 = vlaneseq
  %v157 = vshrl.u32 %v156, 7
  %v158 = vsub.s32 0, %v157
  %v159 = vrot.slane %v79, %v158
  %v160 = vlaneseq
  %v161 = vshrl.u32 %v160, 7
  %v162 = vsub.s32 0, %v161
  %v163 = vrot.slane %v83, %v162
  %v164 = vlaneseq
  %v165 = vshrl.u32 %v164, 7
  %v166 = vsub.s32 0, %v165
  %v167 = vrot.slane %v87, %v166
  %v168 = vlaneseq
  %v169 = vshrl.u32 %v168, 7
  %v170 = vsub.s32 0, %v169
  %v171 = vrot.slane %v91, %v170
  %v172 = vlaneseq
  %v173 = vshrl.u32 %v172, 7
  %v174 = vsub.s32 0, %v173
  %v175 = vrot.slane %v95, %v174
  %v176 = vlaneseq
  %v177 = vshrl.u32 %v176, 7
  %v178 = vsub.s32 0, %v177
  %v179 = vrot.slane %v99, %v178
  %v180 = vlaneseq
  %v181 = vshrl.u32 %v180, 7
  %v182 = vsub.s32 0, %v181
  %v183 = vrot.slane %v103, %v182
  %v184 = vlaneseq
  %v185 = vshrl.u32 %v184, 7
  %v186 = vsub.s32 0, %v185
  %v187 = vrot.slane %v107, %v186
  %v188 = vlaneseq
  %v189 = vshrl.u32 %v188, 7
  %v190 = vsub.s32 0, %v189
  %v191 = vrot.slane %v111, %v190
  %v192 = vmul.f32 %v38, %v131
  %v193 = vmul.f32 %v38, %v135
  %v194 = vmul.f32 %v38, %v139
  %v195 = vmul.f32 %v38, %v143
  %v196 = vmul.f32 %v38, %v147
  %v197 = vmul.f32 %v38, %v151
  %v198 = vmul.f32 %v38, %v155
  %v199 = vmul.f32 %v38, %v159
  %v200 = vmul.f32 %v38, %v163
  %v201 = vmul.f32 %v38, %v167
  %v202 = vmul.f32 %v38, %v171
  %v203 = vmul.f32 %v38, %v175
  %v204 = vmul.f32 %v38, %v179
  %v205 = vmul.f32 %v38, %v183
  %v206 = vmul.f32 %v38, %v187
  %v207 = vmul.f32 %v38, %v191
  %v208 = vadd.f32 %v33, %v192
  %v209 = vadd.f32 %v33, %v193
  %v210 = vadd.f32 %v33, %v194
  %v211 = vadd.f32 %v33, %v195
  %v212 = vadd.f32 %v33, %v196
  %v213 = vadd.f32 %v33, %v197
  %v214 = vadd.f32 %v33, %v198
  %v215 = vadd.f32 %v33, %v199
  %v216 = vadd.f32 %v33, %v200
  %v217 = vadd.f32 %v33, %v201
  %v218 = vadd.f32 %v33, %v202
  %v219 = vadd.f32 %v33, %v203
  %v220 = vadd.f32 %v33, %v204
  %v221 = vadd.f32 %v33, %v205
  %v222 = vadd.f32 %v33, %v206
  %v223 = vadd.f32 %v33, %v207
  %224 = vset.pattern.permute.xlu0 1
  %225 = vperm.xlu0 %224, %v28
  %v226 = vpop.permute.xlu0 %225
  %v228 = vlaneseq
  %v229 = vshrl.u32 %v228, 7
  %v230 = vsub.s32 1, %v229
  %v231 = vrot.slane %v20, %v230
  %v232 = vlaneseq
  %v233 = vshrl.u32 %v232, 7
  %v234 = vsub.s32 5, %v233
  %v235 = vrot.slane %v20, %v234
  %v236 = vlaneseq
  %v237 = vshrl.u32 %v236, 7
  %v238 = vsub.s32 1, %v237
  %v239 = vrot.slane %v21, %v238
  %v240 = vlaneseq
  %v241 = vshrl.u32 %v240, 7
  %v242 = vsub.s32 5, %v241
  %v243 = vrot.slane %v21, %v242
  %v244 = vlaneseq
  %v245 = vshrl.u32 %v244, 7
  %v246 = vsub.s32 1, %v245
  %v247 = vrot.slane %v22, %v246
  %v248 = vlaneseq
  %v249 = vshrl.u32 %v248, 7
  %v250 = vsub.s32 5, %v249
  %v251 = vrot.slane %v22, %v250
  %v252 = vlaneseq
  %v253 = vshrl.u32 %v252, 7
  %v254 = vsub.s32 1, %v253
  %v255 = vrot.slane %v23, %v254
  %v256 = vlaneseq
  %v257 = vshrl.u32 %v256, 7
  %v258 = vsub.s32 5, %v257
  %v259 = vrot.slane %v23, %v258
  %v260 = vlaneseq
  %v261 = vshrl.u32 %v260, 7
  %v262 = vsub.s32 1, %v261
  %v263 = vrot.slane %v24, %v262
  %v264 = vlaneseq
  %v265 = vshrl.u32 %v264, 7
  %v266 = vsub.s32 5, %v265
  %v267 = vrot.slane %v24, %v266
  %v268 = vlaneseq
  %v269 = vshrl.u32 %v268, 7
  %v270 = vsub.s32 1, %v269
  %v271 = vrot.slane %v25, %v270
  %v272 = vlaneseq
  %v273 = vshrl.u32 %v272, 7
  %v274 = vsub.s32 5, %v273
  %v275 = vrot.slane %v25, %v274
  %v276 = vlaneseq
  %v277 = vshrl.u32 %v276, 7
  %v278 = vsub.s32 1, %v277
  %v279 = vrot.slane %v26, %v278
  %v280 = vlaneseq
  %v281 = vshrl.u32 %v280, 7
  %v282 = vsub.s32 5, %v281
  %v283 = vrot.slane %v26, %v282
  %v284 = vlaneseq
  %v285 = vshrl.u32 %v284, 7
  %v286 = vsub.s32 1, %v285
  %v287 = vrot.slane %v27, %v286
  %v288 = vlaneseq
  %v289 = vshrl.u32 %v288, 7
  %v290 = vsub.s32 5, %v289
  %v291 = vrot.slane %v27, %v290
  %v308 = vlaneseq
  %v309 = vshrl.u32 %v308, 7
  %v310 = vsub.s32 1, %v309
  %v311 = vrot.slane %v231, %v310
  %v312 = vlaneseq
  %v313 = vshrl.u32 %v312, 7
  %v314 = vsub.s32 1, %v313
  %v315 = vrot.slane %v235, %v314
  %v316 = vlaneseq
  %v317 = vshrl.u32 %v316, 7
  %v318 = vsub.s32 1, %v317
  %v319 = vrot.slane %v239, %v318
  %v320 = vlaneseq
  %v321 = vshrl.u32 %v320, 7
  %v322 = vsub.s32 1, %v321
  %v323 = vrot.slane %v243, %v322
  %v324 = vlaneseq
  %v325 = vshrl.u32 %v324, 7
  %v326 = vsub.s32 1, %v325
  %v327 = vrot.slane %v247, %v326
  %v328 = vlaneseq
  %v329 = vshrl.u32 %v328, 7
  %v330 = vsub.s32 1, %v329
  %v331 = vrot.slane %v251, %v330
  %v332 = vlaneseq
  %v333 = vshrl.u32 %v332, 7
  %v334 = vsub.s32 1, %v333
  %v335 = vrot.slane %v255, %v334
  %v336 = vlaneseq
  %v337 = vshrl.u32 %v336, 7
  %v338 = vsub.s32 1, %v337
  %v339 = vrot.slane %v259, %v338
  %v340 = vlaneseq
  %v341 = vshrl.u32 %v340, 7
  %v342 = vsub.s32 1, %v341
  %v343 = vrot.slane %v263, %v342
  %v344 = vlaneseq
  %v345 = vshrl.u32 %v344, 7
  %v346 = vsub.s32 1, %v345
  %v347 = vrot.slane %v267, %v346
  %v348 = vlaneseq
  %v349 = vshrl.u32 %v348, 7
  %v350 = vsub.s32 1, %v349
  %v351 = vrot.slane %v271, %v350
  %v352 = vlaneseq
  %v353 = vshrl.u32 %v352, 7
  %v354 = vsub.s32 1, %v353
  %v355 = vrot.slane %v275, %v354
  %v356 = vlaneseq
  %v357 = vshrl.u32 %v356, 7
  %v358 = vsub.s32 1, %v357
  %v359 = vrot.slane %v279, %v358
  %v360 = vlaneseq
  %v361 = vshrl.u32 %v360, 7
  %v362 = vsub.s32 1, %v361
  %v363 = vrot.slane %v283, %v362
  %v364 = vlaneseq
  %v365 = vshrl.u32 %v364, 7
  %v366 = vsub.s32 1, %v365
  %v367 = vrot.slane %v287, %v366
  %v368 = vlaneseq
  %v369 = vshrl.u32 %v368, 7
  %v370 = vsub.s32 1, %v369
  %v371 = vrot.slane %v291, %v370
  %v372 = vmul.f32 %v226, %v311
  %v373 = vmul.f32 %v226, %v315
  %v374 = vmul.f32 %v226, %v319
  %v375 = vmul.f32 %v226, %v323
  %v376 = vmul.f32 %v226, %v327
  %v377 = vmul.f32 %v226, %v331
  %v378 = vmul.f32 %v226, %v335
  %v379 = vmul.f32 %v226, %v339
  %v380 = vmul.f32 %v226, %v343
  %v381 = vmul.f32 %v226, %v347
  %v382 = vmul.f32 %v226, %v351
  %v383 = vmul.f32 %v226, %v355
  %v384 = vmul.f32 %v226, %v359
  %v385 = vmul.f32 %v226, %v363
  %v386 = vmul.f32 %v226, %v367
  %v387 = vmul.f32 %v226, %v371
  %v388 = vadd.f32 %v208, %v372
  %v389 = vadd.f32 %v209, %v373
  %v390 = vadd.f32 %v210, %v374
  %v391 = vadd.f32 %v211, %v375
  %v392 = vadd.f32 %v212, %v376
  %v393 = vadd.f32 %v213, %v377
  %v394 = vadd.f32 %v214, %v378
  %v395 = vadd.f32 %v215, %v379
  %v396 = vadd.f32 %v216, %v380
  %v397 = vadd.f32 %v217, %v381
  %v398 = vadd.f32 %v218, %v382
  %v399 = vadd.f32 %v219, %v383
  %v400 = vadd.f32 %v220, %v384
  %v401 = vadd.f32 %v221, %v385
  %v402 = vadd.f32 %v222, %v386
  %v403 = vadd.f32 %v223, %v387
  %404 = vset.pattern.permute.xlu0 2
  %405 = vperm.xlu0 %404, %v28
  %v406 = vpop.permute.xlu0 %405
  %v408 = vlaneseq
  %v409 = vshrl.u32 %v408, 7
  %v410 = vsub.s32 2, %v409
  %v411 = vrot.slane %v20, %v410
  %v412 = vlaneseq
  %v413 = vshrl.u32 %v412, 7
  %v414 = vsub.s32 6, %v413
  %v415 = vrot.slane %v20, %v414
  %v416 = vlaneseq
  %v417 = vshrl.u32 %v416, 7
  %v418 = vsub.s32 2, %v417
  %v419 = vrot.slane %v21, %v418
  %v420 = vlaneseq
  %v421 = vshrl.u32 %v420, 7
  %v422 = vsub.s32 6, %v421
  %v423 = vrot.slane %v21, %v422
  %v424 = vlaneseq
  %v425 = vshrl.u32 %v424, 7
  %v426 = vsub.s32 2, %v425
  %v427 = vrot.slane %v22, %v426
  %v428 = vlaneseq
  %v429 = vshrl.u32 %v428, 7
  %v430 = vsub.s32 6, %v429
  %v431 = vrot.slane %v22, %v430
  %v432 = vlaneseq
  %v433 = vshrl.u32 %v432, 7
  %v434 = vsub.s32 2, %v433
  %v435 = vrot.slane %v23, %v434
  %v436 = vlaneseq
  %v437 = vshrl.u32 %v436, 7
  %v438 = vsub.s32 6, %v437
  %v439 = vrot.slane %v23, %v438
  %v440 = vlaneseq
  %v441 = vshrl.u32 %v440, 7
  %v442 = vsub.s32 2, %v441
  %v443 = vrot.slane %v24, %v442
  %v444 = vlaneseq
  %v445 = vshrl.u32 %v444, 7
  %v446 = vsub.s32 6, %v445
  %v447 = vrot.slane %v24, %v446
  %v448 = vlaneseq
  %v449 = vshrl.u32 %v448, 7
  %v450 = vsub.s32 2, %v449
  %v451 = vrot.slane %v25, %v450
  %v452 = vlaneseq
  %v453 = vshrl.u32 %v452, 7
  %v454 = vsub.s32 6, %v453
  %v455 = vrot.slane %v25, %v454
  %v456 = vlaneseq
  %v457 = vshrl.u32 %v456, 7
  %v458 = vsub.s32 2, %v457
  %v459 = vrot.slane %v26, %v458
  %v460 = vlaneseq
  %v461 = vshrl.u32 %v460, 7
  %v462 = vsub.s32 6, %v461
  %v463 = vrot.slane %v26, %v462
  %v464 = vlaneseq
  %v465 = vshrl.u32 %v464, 7
  %v466 = vsub.s32 2, %v465
  %v467 = vrot.slane %v27, %v466
  %v468 = vlaneseq
  %v469 = vshrl.u32 %v468, 7
  %v470 = vsub.s32 6, %v469
  %v471 = vrot.slane %v27, %v470
  %v488 = vlaneseq
  %v489 = vshrl.u32 %v488, 7
  %v490 = vsub.s32 2, %v489
  %v491 = vrot.slane %v411, %v490
  %v492 = vlaneseq
  %v493 = vshrl.u32 %v492, 7
  %v494 = vsub.s32 2, %v493
  %v495 = vrot.slane %v415, %v494
  %v496 = vlaneseq
  %v497 = vshrl.u32 %v496, 7
  %v498 = vsub.s32 2, %v497
  %v499 = vrot.slane %v419, %v498
  %v500 = vlaneseq
  %v501 = vshrl.u32 %v500, 7
  %v502 = vsub.s32 2, %v501
  %v503 = vrot.slane %v423, %v502
  %v504 = vlaneseq
  %v505 = vshrl.u32 %v504, 7
  %v506 = vsub.s32 2, %v505
  %v507 = vrot.slane %v427, %v506
  %v508 = vlaneseq
  %v509 = vshrl.u32 %v508, 7
  %v510 = vsub.s32 2, %v509
  %v511 = vrot.slane %v431, %v510
  %v512 = vlaneseq
  %v513 = vshrl.u32 %v512, 7
  %v514 = vsub.s32 2, %v513
  %v515 = vrot.slane %v435, %v514
  %v516 = vlaneseq
  %v517 = vshrl.u32 %v516, 7
  %v518 = vsub.s32 2, %v517
  %v519 = vrot.slane %v439, %v518
  %v520 = vlaneseq
  %v521 = vshrl.u32 %v520, 7
  %v522 = vsub.s32 2, %v521
  %v523 = vrot.slane %v443, %v522
  %v524 = vlaneseq
  %v525 = vshrl.u32 %v524, 7
  %v526 = vsub.s32 2, %v525
  %v527 = vrot.slane %v447, %v526
  %v528 = vlaneseq
  %v529 = vshrl.u32 %v528, 7
  %v530 = vsub.s32 2, %v529
  %v531 = vrot.slane %v451, %v530
  %v532 = vlaneseq
  %v533 = vshrl.u32 %v532, 7
  %v534 = vsub.s32 2, %v533
  %v535 = vrot.slane %v455, %v534
  %v536 = vlaneseq
  %v537 = vshrl.u32 %v536, 7
  %v538 = vsub.s32 2, %v537
  %v539 = vrot.slane %v459, %v538
  %v540 = vlaneseq
  %v541 = vshrl.u32 %v540, 7
  %v542 = vsub.s32 2, %v541
  %v543 = vrot.slane %v463, %v542
  %v544 = vlaneseq
  %v545 = vshrl.u32 %v544, 7
  %v546 = vsub.s32 2, %v545
  %v547 = vrot.slane %v467, %v546
  %v548 = vlaneseq
  %v549 = vshrl.u32 %v548, 7
  %v550 = vsub.s32 2, %v549
  %v551 = vrot.slane %v471, %v550
  %v552 = vmul.f32 %v406, %v491
  %v553 = vmul.f32 %v406, %v495
  %v554 = vmul.f32 %v406, %v499
  %v555 = vmul.f32 %v406, %v503
  %v556 = vmul.f32 %v406, %v507
  %v557 = vmul.f32 %v406, %v511
  %v558 = vmul.f32 %v406, %v515
  %v559 = vmul.f32 %v406, %v519
  %v560 = vmul.f32 %v406, %v523
  %v561 = vmul.f32 %v406, %v527
  %v562 = vmul.f32 %v406, %v531
  %v563 = vmul.f32 %v406, %v535
  %v564 = vmul.f32 %v406, %v539
  %v565 = vmul.f32 %v406, %v543
  %v566 = vmul.f32 %v406, %v547
  %v567 = vmul.f32 %v406, %v551
  %v568 = vadd.f32 %v388, %v552
  %v569 = vadd.f32 %v389, %v553
  %v570 = vadd.f32 %v390, %v554
  %v571 = vadd.f32 %v391, %v555
  %v572 = vadd.f32 %v392, %v556
  %v573 = vadd.f32 %v393, %v557
  %v574 = vadd.f32 %v394, %v558
  %v575 = vadd.f32 %v395, %v559
  %v576 = vadd.f32 %v396, %v560
  %v577 = vadd.f32 %v397, %v561
  %v578 = vadd.f32 %v398, %v562
  %v579 = vadd.f32 %v399, %v563
  %v580 = vadd.f32 %v400, %v564
  %v581 = vadd.f32 %v401, %v565
  %v582 = vadd.f32 %v402, %v566
  %v583 = vadd.f32 %v403, %v567
  %v584 = vmax.f32 %v568, 0.0
  %v585 = vmax.f32 %v569, 0.0
  %v586 = vmax.f32 %v570, 0.0
  %v587 = vmax.f32 %v571, 0.0
  %v588 = vmax.f32 %v572, 0.0
  %v589 = vmax.f32 %v573, 0.0
  %v590 = vmax.f32 %v574, 0.0
  %v591 = vmax.f32 %v575, 0.0
  %v592 = vmax.f32 %v576, 0.0
  %v593 = vmax.f32 %v577, 0.0
  %v594 = vmax.f32 %v578, 0.0
  %v595 = vmax.f32 %v579, 0.0
  %v596 = vmax.f32 %v580, 0.0
  %v597 = vmax.f32 %v581, 0.0
  %v598 = vmax.f32 %v582, 0.0
  %v599 = vmax.f32 %v583, 0.0
  %v600 = vld [vmem:[%s3] sm:$0xff]
  %v601 = vld [vmem:[%s3 + $0x8] sm:$0xff]
  %v602 = vld [vmem:[%s3 + $0x10] sm:$0xff]
  %v603 = vld [vmem:[%s3 + $0x18] sm:$0xff]
  %v604 = vld [vmem:[%s3 + $0x20] sm:$0xff]
  %v605 = vld [vmem:[%s3 + $0x28] sm:$0xff]
  %v606 = vld [vmem:[%s3 + $0x30] sm:$0xff]
  %v607 = vld [vmem:[%s3 + $0x38] sm:$0xff]
  %v608 = vld [vmem:[%s3 + $0x40] sm:$0xff]
  %v609 = vld [vmem:[%s3 + $0x48] sm:$0xff]
  %v610 = vld [vmem:[%s3 + $0x50] sm:$0xff]
  %v611 = vld [vmem:[%s3 + $0x58] sm:$0xff]
  %v612 = vld [vmem:[%s3 + $0x60] sm:$0xff]
  %v613 = vld [vmem:[%s3 + $0x68] sm:$0xff]
  %v614 = vld [vmem:[%s3 + $0x70] sm:$0xff]
  %v615 = vld [vmem:[%s3 + $0x78] sm:$0xff]
  %v616 = vld [vmem:[%s4] sm:$0x1]
  %v618 = vlaneseq
  %v619 = vshrl.u32 %v618, 7
  %v620 = vsub.s32 0, %v619
  %v621 = vrot.slane %v616, %v620
  %623 = vmatprep.subr.mxu0 0.0
  %624 = vmatpush1.msra.mxu0 %v615
  %625 = vmatprep.subr.mxu0 0.0
  %626 = vmatpush1.msra.mxu0 %v614
  %627 = vmatprep.subr.mxu0 0.0
  %628 = vmatpush1.msra.mxu0 %v613
  %629 = vmatprep.subr.mxu0 0.0
  %630 = vmatpush1.msra.mxu0 %v612
  %631 = vmatprep.subr.mxu0 0.0
  %632 = vmatpush1.msra.mxu0 %v611
  %633 = vmatprep.subr.mxu0 0.0
  %634 = vmatpush1.msra.mxu0 %v610
  %635 = vmatprep.subr.mxu0 0.0
  %636 = vmatpush1.msra.mxu0 %v609
  %637 = vmatprep.subr.mxu0 0.0
  %638 = vmatpush1.msra.mxu0 %v608
  %639 = vmatprep.subr.mxu0 0.0
  %640 = vmatpush1.msra.mxu0 %v607
  %641 = vmatprep.subr.mxu0 0.0
  %642 = vmatpush1.msra.mxu0 %v606
  %643 = vmatprep.subr.mxu0 0.0
  %644 = vmatpush1.msra.mxu0 %v605
  %645 = vmatprep.subr.mxu0 0.0
  %646 = vmatpush1.msra.mxu0 %v604
  %647 = vmatprep.subr.mxu0 0.0
  %648 = vmatpush1.msra.mxu0 %v603
  %649 = vmatprep.subr.mxu0 0.0
  %650 = vmatpush1.msra.mxu0 %v602
  %651 = vmatprep.subr.mxu0 0.0
  %652 = vmatpush1.msra.mxu0 %v601
  %653 = vmatprep.subr.mxu0 0.0
  %654 = vmatpush1.msra.mxu0 %v600
  %655 = vmatprep.subr.mxu0 0.0
  %656 = vmatpush2.msra.mxu0 0.0
  %657 = vmatprep.subr.mxu0 0.0
  %658 = vmatpush2.msra.mxu0 0.0
  %659 = vmatprep.subr.mxu0 0.0
  %660 = vmatpush2.msra.mxu0 0.0
  %661 = vmatprep.subr.mxu0 0.0
  %662 = vmatpush2.msra.mxu0 0.0
  %663 = vmatprep.subr.mxu0 0.0
  %664 = vmatpush2.msra.mxu0 0.0
  %665 = vmatprep.subr.mxu0 0.0
  %666 = vmatpush2.msra.mxu0 0.0
  %667 = vmatprep.subr.mxu0 0.0
  %668 = vmatpush2.msra.mxu0 0.0
  %669 = vmatprep.subr.mxu0 0.0
  %670 = vmatpush2.msra.mxu0 0.0
  %671 = vmatprep.subr.mxu0 0.0
  %672 = vmatpush2.msra.mxu0 0.0
  %673 = vmatprep.subr.mxu0 0.0
  %674 = vmatpush2.msra.mxu0 0.0
  %675 = vmatprep.subr.mxu0 0.0
  %676 = vmatpush2.msra.mxu0 0.0
  %677 = vmatprep.subr.mxu0 0.0
  %678 = vmatpush2.msra.mxu0 0.0
  %679 = vmatprep.subr.mxu0 0.0
  %680 = vmatpush2.msra.mxu0 0.0
  %681 = vmatprep.subr.mxu0 0.0
  %682 = vmatpush2.msra.mxu0 0.0
  %683 = vmatprep.subr.mxu0 0.0
  %684 = vmatpush2.msra.mxu0 0.0
  %685 = vmatprep.subr.mxu0 0.0
  %686 = vmatpush2.msra.mxu0 0.0
  %687 = vmatprep.mubr.f32.mxu0 0.0
  %688 = vmatmul.mubr.f32.gmra.mxu0 %v584
  %v689 = vpop.f32.mrf.mxu0
  %v690 = vadd.f32 %v621, %v689
  %v691 = vpop.f32.mrf.mxu0
  %692 = vdwg.mxu0
  %v693 = vmax.f32 %v690, 0.0
  %vm694 = vcmask 15360
  %695 = vst.msk [vmem:[%s5] sm:$0xff] %vm694, %v693
  %696 = vmatprep.subr.mxu0 0.0
  %697 = vmatpush1.msra.mxu0 %v615
  %698 = vmatprep.subr.mxu0 0.0
  %699 = vmatpush1.msra.mxu0 %v614
  %700 = vmatprep.subr.mxu0 0.0
  %701 = vmatpush1.msra.mxu0 %v613
  %702 = vmatprep.subr.mxu0 0.0
  %703 = vmatpush1.msra.mxu0 %v612
  %704 = vmatprep.subr.mxu0 0.0
  %705 = vmatpush1.msra.mxu0 %v611
  %706 = vmatprep.subr.mxu0 0.0
  %707 = vmatpush1.msra.mxu0 %v610
  %708 = vmatprep.subr.mxu0 0.0
  %709 = vmatpush1.msra.mxu0 %v609
  %710 = vmatprep.subr.mxu0 0.0
  %711 = vmatpush1.msra.mxu0 %v608
  %712 = vmatprep.subr.mxu0 0.0
  %713 = vmatpush1.msra.mxu0 %v607
  %714 = vmatprep.subr.mxu0 0.0
  %715 = vmatpush1.msra.mxu0 %v606
  %716 = vmatprep.subr.mxu0 0.0
  %717 = vmatpush1.msra.mxu0 %v605
  %718 = vmatprep.subr.mxu0 0.0
  %719 = vmatpush1.msra.mxu0 %v604
  %720 = vmatprep.subr.mxu0 0.0
  %721 = vmatpush1.msra.mxu0 %v603
  %722 = vmatprep.subr.mxu0 0.0
  %723 = vmatpush1.msra.mxu0 %v602
  %724 = vmatprep.subr.mxu0 0.0
  %725 = vmatpush1.msra.mxu0 %v601
  %726 = vmatprep.subr.mxu0 0.0
  %727 = vmatpush1.msra.mxu0 %v600
  %728 = vmatprep.subr.mxu0 0.0
  %729 = vmatpush2.msra.mxu0 0.0
  %730 = vmatprep.subr.mxu0 0.0
  %731 = vmatpush2.msra.mxu0 0.0
  %732 = vmatprep.subr.mxu0 0.0
  %733 = vmatpush2.msra.mxu0 0.0
  %734 = vmatprep.subr.mxu0 0.0
  %735 = vmatpush2.msra.mxu0 0.0
  %736 = vmatprep.subr.mxu0 0.0
  %737 = vmatpush2.msra.mxu0 0.0
  %738 = vmatprep.subr.mxu0 0.0
  %739 = vmatpush2.msra.mxu0 0.0
  %740 = vmatprep.subr.mxu0 0.0
  %741 = vmatpush2.msra.mxu0 0.0
  %742 = vmatprep.subr.mxu0 0.0
  %743 = vmatpush2.msra.mxu0 0.0
  %744 = vmatprep.subr.mxu0 0.0
  %745 = vmatpush2.msra.mxu0 0.0
  %746 = vmatprep.subr.mxu0 0.0
  %747 = vmatpush2.msra.mxu0 0.0
  %748 = vmatprep.subr.mxu0 0.0
  %749 = vmatpush2.msra.mxu0 0.0
  %750 = vmatprep.subr.mxu0 0.0
  %751 = vmatpush2.msra.mxu0 0.0
  %752 = vmatprep.subr.mxu0 0.0
  %753 = vmatpush2.msra.mxu0 0.0
  %754 = vmatprep.subr.mxu0 0.0
  %755 = vmatpush2.msra.mxu0 0.0
  %756 = vmatprep.subr.mxu0 0.0
  %757 = vmatpush2.msra.mxu0 0.0
  %758 = vmatprep.subr.mxu0 0.0
  %759 = vmatpush2.msra.mxu0 0.0
  %760 = vmatprep.mubr.f32.mxu0 0.0
  %761 = vmatmul.mubr.f32.gmra.mxu0 %v585
  %v762 = vpop.f32.mrf.mxu0
  %v763 = vadd.f32 %v621, %v762
  %v764 = vpop.f32.mrf.mxu0
  %765 = vdwg.mxu0
  %v766 = vmax.f32 %v763, 0.0
  %768 = vrot.lane.b32.xlu0 %v766, 2
  %v769 = vpop.permute.xlu0 %768
  %vm771 = vcmask 31760
  %772 = vst.msk [vmem:[%s5] sm:$0xff] %vm771, %v769
  %773 = vmatprep.subr.mxu0 0.0
  %774 = vmatpush1.msra.mxu0 %v615
  %775 = vmatprep.subr.mxu0 0.0
  %776 = vmatpush1.msra.mxu0 %v614
  %777 = vmatprep.subr.mxu0 0.0
  %778 = vmatpush1.msra.mxu0 %v613
  %779 = vmatprep.subr.mxu0 0.0
  %780 = vmatpush1.msra.mxu0 %v612
  %781 = vmatprep.subr.mxu0 0.0
  %782 = vmatpush1.msra.mxu0 %v611
  %783 = vmatprep.subr.mxu0 0.0
  %784 = vmatpush1.msra.mxu0 %v610
  %785 = vmatprep.subr.mxu0 0.0
  %786 = vmatpush1.msra.mxu0 %v609
  %787 = vmatprep.subr.mxu0 0.0
  %788 = vmatpush1.msra.mxu0 %v608
  %789 = vmatprep.subr.mxu0 0.0
  %790 = vmatpush1.msra.mxu0 %v607
  %791 = vmatprep.subr.mxu0 0.0
  %792 = vmatpush1.msra.mxu0 %v606
  %793 = vmatprep.subr.mxu0 0.0
  %794 = vmatpush1.msra.mxu0 %v605
  %795 = vmatprep.subr.mxu0 0.0
  %796 = vmatpush1.msra.mxu0 %v604
  %797 = vmatprep.subr.mxu0 0.0
  %798 = vmatpush1.msra.mxu0 %v603
  %799 = vmatprep.subr.mxu0 0.0
  %800 = vmatpush1.msra.mxu0 %v602
  %801 = vmatprep.subr.mxu0 0.0
  %802 = vmatpush1.msra.mxu0 %v601
  %803 = vmatprep.subr.mxu0 0.0
  %804 = vmatpush1.msra.mxu0 %v600
  %805 = vmatprep.subr.mxu0 0.0
  %806 = vmatpush2.msra.mxu0 0.0
  %807 = vmatprep.subr.mxu0 0.0
  %808 = vmatpush2.msra.mxu0 0.0
  %809 = vmatprep.subr.mxu0 0.0
  %810 = vmatpush2.msra.mxu0 0.0
  %811 = vmatprep.subr.mxu0 0.0
  %812 = vmatpush2.msra.mxu0 0.0
  %813 = vmatprep.subr.mxu0 0.0
  %814 = vmatpush2.msra.mxu0 0.0
  %815 = vmatprep.subr.mxu0 0.0
  %816 = vmatpush2.msra.mxu0 0.0
  %817 = vmatprep.subr.mxu0 0.0
  %818 = vmatpush2.msra.mxu0 0.0
  %819 = vmatprep.subr.mxu0 0.0
  %820 = vmatpush2.msra.mxu0 0.0
  %821 = vmatprep.subr.mxu0 0.0
  %822 = vmatpush2.msra.mxu0 0.0
  %823 = vmatprep.subr.mxu0 0.0
  %824 = vmatpush2.msra.mxu0 0.0
  %825 = vmatprep.subr.mxu0 0.0
  %826 = vmatpush2.msra.mxu0 0.0
  %827 = vmatprep.subr.mxu0 0.0
  %828 = vmatpush2.msra.mxu0 0.0
  %829 = vmatprep.subr.mxu0 0.0
  %830 = vmatpush2.msra.mxu0 0.0
  %831 = vmatprep.subr.mxu0 0.0
  %832 = vmatpush2.msra.mxu0 0.0
  %833 = vmatprep.subr.mxu0 0.0
  %834 = vmatpush2.msra.mxu0 0.0
  %835 = vmatprep.subr.mxu0 0.0
  %836 = vmatpush2.msra.mxu0 0.0
  %837 = vmatprep.mubr.f32.mxu0 0.0
  %838 = vmatmul.mubr.f32.gmra.mxu0 %v586
  %v839 = vpop.f32.mrf.mxu0
  %v840 = vadd.f32 %v621, %v839
  %v841 = vpop.f32.mrf.mxu0
  %842 = vdwg.mxu0
  %v843 = vmax.f32 %v840, 0.0
  %845 = vrot.lane.b32.xlu0 %v843, 4
  %v846 = vpop.permute.xlu0 %845
  %vm848 = vcmask 48160
  %849 = vst.msk [vmem:[%s5] sm:$0xff] %vm848, %v846
  %850 = vmatprep.subr.mxu0 0.0
  %851 = vmatpush1.msra.mxu0 %v615
  %852 = vmatprep.subr.mxu0 0.0
  %853 = vmatpush1.msra.mxu0 %v614
  %854 = vmatprep.subr.mxu0 0.0
  %855 = vmatpush1.msra.mxu0 %v613
  %856 = vmatprep.subr.mxu0 0.0
  %857 = vmatpush1.msra.mxu0 %v612
  %858 = vmatprep.subr.mxu0 0.0
  %859 = vmatpush1.msra.mxu0 %v611
  %860 = vmatprep.subr.mxu0 0.0
  %861 = vmatpush1.msra.mxu0 %v610
  %862 = vmatprep.subr.mxu0 0.0
  %863 = vmatpush1.msra.mxu0 %v609
  %864 = vmatprep.subr.mxu0 0.0
  %865 = vmatpush1.msra.mxu0 %v608
  %866 = vmatprep.subr.mxu0 0.0
  %867 = vmatpush1.msra.mxu0 %v607
  %868 = vmatprep.subr.mxu0 0.0
  %869 = vmatpush1.msra.mxu0 %v606
  %870 = vmatprep.subr.mxu0 0.0
  %871 = vmatpush1.msra.mxu0 %v605
  %872 = vmatprep.subr.mxu0 0.0
  %873 = vmatpush1.msra.mxu0 %v604
  %874 = vmatprep.subr.mxu0 0.0
  %875 = vmatpush1.msra.mxu0 %v603
  %876 = vmatprep.subr.mxu0 0.0
  %877 = vmatpush1.msra.mxu0 %v602
  %878 = vmatprep.subr.mxu0 0.0
  %879 = vmatpush1.msra.mxu0 %v601
  %880 = vmatprep.subr.mxu0 0.0
  %881 = vmatpush1.msra.mxu0 %v600
  %882 = vmatprep.subr.mxu0 0.0
  %883 = vmatpush2.msra.mxu0 0.0
  %884 = vmatprep.subr.mxu0 0.0
  %885 = vmatpush2.msra.mxu0 0.0
  %886 = vmatprep.subr.mxu0 0.0
  %887 = vmatpush2.msra.mxu0 0.0
  %888 = vmatprep.subr.mxu0 0.0
  %889 = vmatpush2.msra.mxu0 0.0
  %890 = vmatprep.subr.mxu0 0.0
  %891 = vmatpush2.msra.mxu0 0.0
  %892 = vmatprep.subr.mxu0 0.0
  %893 = vmatpush2.msra.mxu0 0.0
  %894 = vmatprep.subr.mxu0 0.0
  %895 = vmatpush2.msra.mxu0 0.0
  %896 = vmatprep.subr.mxu0 0.0
  %897 = vmatpush2.msra.mxu0 0.0
  %898 = vmatprep.subr.mxu0 0.0
  %899 = vmatpush2.msra.mxu0 0.0
  %900 = vmatprep.subr.mxu0 0.0
  %901 = vmatpush2.msra.mxu0 0.0
  %902 = vmatprep.subr.mxu0 0.0
  %903 = vmatpush2.msra.mxu0 0.0
  %904 = vmatprep.subr.mxu0 0.0
  %905 = vmatpush2.msra.mxu0 0.0
  %906 = vmatprep.subr.mxu0 0.0
  %907 = vmatpush2.msra.mxu0 0.0
  %908 = vmatprep.subr.mxu0 0.0
  %909 = vmatpush2.msra.mxu0 0.0
  %910 = vmatprep.subr.mxu0 0.0
  %911 = vmatpush2.msra.mxu0 0.0
  %912 = vmatprep.subr.mxu0 0.0
  %913 = vmatpush2.msra.mxu0 0.0
  %914 = vmatprep.mubr.f32.mxu0 0.0
  %915 = vmatmul.mubr.f32.gmra.mxu0 %v587
  %v916 = vpop.f32.mrf.mxu0
  %v917 = vadd.f32 %v621, %v916
  %v918 = vpop.f32.mrf.mxu0
  %919 = vdwg.mxu0
  %v920 = vmax.f32 %v917, 0.0
  %922 = vrot.lane.b32.xlu0 %v920, 6
  %v923 = vpop.permute.xlu0 %922
  %vm925 = vcmask 64560
  %926 = vst.msk [vmem:[%s5] sm:$0xff] %vm925, %v923
  %927 = vmatprep.subr.mxu0 0.0
  %928 = vmatpush1.msra.mxu0 %v615
  %929 = vmatprep.subr.mxu0 0.0
  %930 = vmatpush1.msra.mxu0 %v614
  %931 = vmatprep.subr.mxu0 0.0
  %932 = vmatpush1.msra.mxu0 %v613
  %933 = vmatprep.subr.mxu0 0.0
  %934 = vmatpush1.msra.mxu0 %v612
  %935 = vmatprep.subr.mxu0 0.0
  %936 = vmatpush1.msra.mxu0 %v611
  %937 = vmatprep.subr.mxu0 0.0
  %938 = vmatpush1.msra.mxu0 %v610
  %939 = vmatprep.subr.mxu0 0.0
  %940 = vmatpush1.msra.mxu0 %v609
  %941 = vmatprep.subr.mxu0 0.0
  %942 = vmatpush1.msra.mxu0 %v608
  %943 = vmatprep.subr.mxu0 0.0
  %944 = vmatpush1.msra.mxu0 %v607
  %945 = vmatprep.subr.mxu0 0.0
  %946 = vmatpush1.msra.mxu0 %v606
  %947 = vmatprep.subr.mxu0 0.0
  %948 = vmatpush1.msra.mxu0 %v605
  %949 = vmatprep.subr.mxu0 0.0
  %950 = vmatpush1.msra.mxu0 %v604
  %951 = vmatprep.subr.mxu0 0.0
  %952 = vmatpush1.msra.mxu0 %v603
  %953 = vmatprep.subr.mxu0 0.0
  %954 = vmatpush1.msra.mxu0 %v602
  %955 = vmatprep.subr.mxu0 0.0
  %956 = vmatpush1.msra.mxu0 %v601
  %957 = vmatprep.subr.mxu0 0.0
  %958 = vmatpush1.msra.mxu0 %v600
  %959 = vmatprep.subr.mxu0 0.0
  %960 = vmatpush2.msra.mxu0 0.0
  %961 = vmatprep.subr.mxu0 0.0
  %962 = vmatpush2.msra.mxu0 0.0
  %963 = vmatprep.subr.mxu0 0.0
  %964 = vmatpush2.msra.mxu0 0.0
  %965 = vmatprep.subr.mxu0 0.0
  %966 = vmatpush2.msra.mxu0 0.0
  %967 = vmatprep.subr.mxu0 0.0
  %968 = vmatpush2.msra.mxu0 0.0
  %969 = vmatprep.subr.mxu0 0.0
  %970 = vmatpush2.msra.mxu0 0.0
  %971 = vmatprep.subr.mxu0 0.0
  %972 = vmatpush2.msra.mxu0 0.0
  %973 = vmatprep.subr.mxu0 0.0
  %974 = vmatpush2.msra.mxu0 0.0
  %975 = vmatprep.subr.mxu0 0.0
  %976 = vmatpush2.msra.mxu0 0.0
  %977 = vmatprep.subr.mxu0 0.0
  %978 = vmatpush2.msra.mxu0 0.0
  %979 = vmatprep.subr.mxu0 0.0
  %980 = vmatpush2.msra.mxu0 0.0
  %981 = vmatprep.subr.mxu0 0.0
  %982 = vmatpush2.msra.mxu0 0.0
  %983 = vmatprep.subr.mxu0 0.0
  %984 = vmatpush2.msra.mxu0 0.0
  %985 = vmatprep.subr.mxu0 0.0
  %986 = vmatpush2.msra.mxu0 0.0
  %987 = vmatprep.subr.mxu0 0.0
  %988 = vmatpush2.msra.mxu0 0.0
  %989 = vmatprep.subr.mxu0 0.0
  %990 = vmatpush2.msra.mxu0 0.0
  %991 = vmatprep.mubr.f32.mxu0 0.0
  %992 = vmatmul.mubr.f32.gmra.mxu0 %v588
  %v993 = vpop.f32.mrf.mxu0
  %v994 = vadd.f32 %v621, %v993
  %v995 = vpop.f32.mrf.mxu0
  %996 = vdwg.mxu0
  %v997 = vmax.f32 %v994, 0.0
  %999 = vrot.lane.b32.xlu0 %v997, 8
  %v1000 = vpop.permute.xlu0 %999
  %vm1002 = vcmask 80960
  %1003 = vst.msk [vmem:[%s5] sm:$0xff] %vm1002, %v1000
  %1004 = vmatprep.subr.mxu0 0.0
  %1005 = vmatpush1.msra.mxu0 %v615
  %1006 = vmatprep.subr.mxu0 0.0
  %1007 = vmatpush1.msra.mxu0 %v614
  %1008 = vmatprep.subr.mxu0 0.0
  %1009 = vmatpush1.msra.mxu0 %v613
  %1010 = vmatprep.subr.mxu0 0.0
  %1011 = vmatpush1.msra.mxu0 %v612
  %1012 = vmatprep.subr.mxu0 0.0
  %1013 = vmatpush1.msra.mxu0 %v611
  %1014 = vmatprep.subr.mxu0 0.0
  %1015 = vmatpush1.msra.mxu0 %v610
  %1016 = vmatprep.subr.mxu0 0.0
  %1017 = vmatpush1.msra.mxu0 %v609
  %1018 = vmatprep.subr.mxu0 0.0
  %1019 = vmatpush1.msra.mxu0 %v608
  %1020 = vmatprep.subr.mxu0 0.0
  %1021 = vmatpush1.msra.mxu0 %v607
  %1022 = vmatprep.subr.mxu0 0.0
  %1023 = vmatpush1.msra.mxu0 %v606
  %1024 = vmatprep.subr.mxu0 0.0
  %1025 = vmatpush1.msra.mxu0 %v605
  %1026 = vmatprep.subr.mxu0 0.0
  %1027 = vmatpush1.msra.mxu0 %v604
  %1028 = vmatprep.subr.mxu0 0.0
  %1029 = vmatpush1.msra.mxu0 %v603
  %1030 = vmatprep.subr.mxu0 0.0
  %1031 = vmatpush1.msra.mxu0 %v602
  %1032 = vmatprep.subr.mxu0 0.0
  %1033 = vmatpush1.msra.mxu0 %v601
  %1034 = vmatprep.subr.mxu0 0.0
  %1035 = vmatpush1.msra.mxu0 %v600
  %1036 = vmatprep.subr.mxu0 0.0
  %1037 = vmatpush2.msra.mxu0 0.0
  %1038 = vmatprep.subr.mxu0 0.0
  %1039 = vmatpush2.msra.mxu0 0.0
  %1040 = vmatprep.subr.mxu0 0.0
  %1041 = vmatpush2.msra.mxu0 0.0
  %1042 = vmatprep.subr.mxu0 0.0
  %1043 = vmatpush2.msra.mxu0 0.0
  %1044 = vmatprep.subr.mxu0 0.0
  %1045 = vmatpush2.msra.mxu0 0.0
  %1046 = vmatprep.subr.mxu0 0.0
  %1047 = vmatpush2.msra.mxu0 0.0
  %1048 = vmatprep.subr.mxu0 0.0
  %1049 = vmatpush2.msra.mxu0 0.0
  %1050 = vmatprep.subr.mxu0 0.0
  %1051 = vmatpush2.msra.mxu0 0.0
  %1052 = vmatprep.subr.mxu0 0.0
  %1053 = vmatpush2.msra.mxu0 0.0
  %1054 = vmatprep.subr.mxu0 0.0
  %1055 = vmatpush2.msra.mxu0 0.0
  %1056 = vmatprep.subr.mxu0 0.0
  %1057 = vmatpush2.msra.mxu0 0.0
  %1058 = vmatprep.subr.mxu0 0.0
  %1059 = vmatpush2.msra.mxu0 0.0
  %1060 = vmatprep.subr.mxu0 0.0
  %1061 = vmatpush2.msra.mxu0 0.0
  %1062 = vmatprep.subr.mxu0 0.0
  %1063 = vmatpush2.msra.mxu0 0.0
  %1064 = vmatprep.subr.mxu0 0.0
  %1065 = vmatpush2.msra.mxu0 0.0
  %1066 = vmatprep.subr.mxu0 0.0
  %1067 = vmatpush2.msra.mxu0 0.0
  %1068 = vmatprep.mubr.f32.mxu0 0.0
  %1069 = vmatmul.mubr.f32.gmra.mxu0 %v589
  %v1070 = vpop.f32.mrf.mxu0
  %v1071 = vadd.f32 %v621, %v1070
  %v1072 = vpop.f32.mrf.mxu0
  %1073 = vdwg.mxu0
  %v1074 = vmax.f32 %v1071, 0.0
  %1076 = vrot.lane.b32.xlu0 %v1074, 10
  %v1077 = vpop.permute.xlu0 %1076
  %vm1079 = vcmask 97360
  %1080 = vst.msk [vmem:[%s5] sm:$0xff] %vm1079, %v1077
  %1081 = vmatprep.subr.mxu0 0.0
  %1082 = vmatpush1.msra.mxu0 %v615
  %1083 = vmatprep.subr.mxu0 0.0
  %1084 = vmatpush1.msra.mxu0 %v614
  %1085 = vmatprep.subr.mxu0 0.0
  %1086 = vmatpush1.msra.mxu0 %v613
  %1087 = vmatprep.subr.mxu0 0.0
  %1088 = vmatpush1.msra.mxu0 %v612
  %1089 = vmatprep.subr.mxu0 0.0
  %1090 = vmatpush1.msra.mxu0 %v611
  %1091 = vmatprep.subr.mxu0 0.0
  %1092 = vmatpush1.msra.mxu0 %v610
  %1093 = vmatprep.subr.mxu0 0.0
  %1094 = vmatpush1.msra.mxu0 %v609
  %1095 = vmatprep.subr.mxu0 0.0
  %1096 = vmatpush1.msra.mxu0 %v608
  %1097 = vmatprep.subr.mxu0 0.0
  %1098 = vmatpush1.msra.mxu0 %v607
  %1099 = vmatprep.subr.mxu0 0.0
  %1100 = vmatpush1.msra.mxu0 %v606
  %1101 = vmatprep.subr.mxu0 0.0
  %1102 = vmatpush1.msra.mxu0 %v605
  %1103 = vmatprep.subr.mxu0 0.0
  %1104 = vmatpush1.msra.mxu0 %v604
  %1105 = vmatprep.subr.mxu0 0.0
  %1106 = vmatpush1.msra.mxu0 %v603
  %1107 = vmatprep.subr.mxu0 0.0
  %1108 = vmatpush1.msra.mxu0 %v602
  %1109 = vmatprep.subr.mxu0 0.0
  %1110 = vmatpush1.msra.mxu0 %v601
  %1111 = vmatprep.subr.mxu0 0.0
  %1112 = vmatpush1.msra.mxu0 %v600
  %1113 = vmatprep.subr.mxu0 0.0
  %1114 = vmatpush2.msra.mxu0 0.0
  %1115 = vmatprep.subr.mxu0 0.0
  %1116 = vmatpush2.msra.mxu0 0.0
  %1117 = vmatprep.subr.mxu0 0.0
  %1118 = vmatpush2.msra.mxu0 0.0
  %1119 = vmatprep.subr.mxu0 0.0
  %1120 = vmatpush2.msra.mxu0 0.0
  %1121 = vmatprep.subr.mxu0 0.0
  %1122 = vmatpush2.msra.mxu0 0.0
  %1123 = vmatprep.subr.mxu0 0.0
  %1124 = vmatpush2.msra.mxu0 0.0
  %1125 = vmatprep.subr.mxu0 0.0
  %1126 = vmatpush2.msra.mxu0 0.0
  %1127 = vmatprep.subr.mxu0 0.0
  %1128 = vmatpush2.msra.mxu0 0.0
  %1129 = vmatprep.subr.mxu0 0.0
  %1130 = vmatpush2.msra.mxu0 0.0
  %1131 = vmatprep.subr.mxu0 0.0
  %1132 = vmatpush2.msra.mxu0 0.0
  %1133 = vmatprep.subr.mxu0 0.0
  %1134 = vmatpush2.msra.mxu0 0.0
  %1135 = vmatprep.subr.mxu0 0.0
  %1136 = vmatpush2.msra.mxu0 0.0
  %1137 = vmatprep.subr.mxu0 0.0
  %1138 = vmatpush2.msra.mxu0 0.0
  %1139 = vmatprep.subr.mxu0 0.0
  %1140 = vmatpush2.msra.mxu0 0.0
  %1141 = vmatprep.subr.mxu0 0.0
  %1142 = vmatpush2.msra.mxu0 0.0
  %1143 = vmatprep.subr.mxu0 0.0
  %1144 = vmatpush2.msra.mxu0 0.0
  %1145 = vmatprep.mubr.f32.mxu0 0.0
  %1146 = vmatmul.mubr.f32.gmra.mxu0 %v590
  %v1147 = vpop.f32.mrf.mxu0
  %v1148 = vadd.f32 %v621, %v1147
  %v1149 = vpop.f32.mrf.mxu0
  %1150 = vdwg.mxu0
  %v1151 = vmax.f32 %v1148, 0.0
  %1153 = vrot.lane.b32.xlu0 %v1151, 12
  %v1154 = vpop.permute.xlu0 %1153
  %vm1156 = vcmask 113760
  %1157 = vst.msk [vmem:[%s5] sm:$0xff] %vm1156, %v1154
  %1158 = vmatprep.subr.mxu0 0.0
  %1159 = vmatpush1.msra.mxu0 %v615
  %1160 = vmatprep.subr.mxu0 0.0
  %1161 = vmatpush1.msra.mxu0 %v614
  %1162 = vmatprep.subr.mxu0 0.0
  %1163 = vmatpush1.msra.mxu0 %v613
  %1164 = vmatprep.subr.mxu0 0.0
  %1165 = vmatpush1.msra.mxu0 %v612
  %1166 = vmatprep.subr.mxu0 0.0
  %1167 = vmatpush1.msra.mxu0 %v611
  %1168 = vmatprep.subr.mxu0 0.0
  %1169 = vmatpush1.msra.mxu0 %v610
  %1170 = vmatprep.subr.mxu0 0.0
  %1171 = vmatpush1.msra.mxu0 %v609
  %1172 = vmatprep.subr.mxu0 0.0
  %1173 = vmatpush1.msra.mxu0 %v608
  %1174 = vmatprep.subr.mxu0 0.0
  %1175 = vmatpush1.msra.mxu0 %v607
  %1176 = vmatprep.subr.mxu0 0.0
  %1177 = vmatpush1.msra.mxu0 %v606
  %1178 = vmatprep.subr.mxu0 0.0
  %1179 = vmatpush1.msra.mxu0 %v605
  %1180 = vmatprep.subr.mxu0 0.0
  %1181 = vmatpush1.msra.mxu0 %v604
  %1182 = vmatprep.subr.mxu0 0.0
  %1183 = vmatpush1.msra.mxu0 %v603
  %1184 = vmatprep.subr.mxu0 0.0
  %1185 = vmatpush1.msra.mxu0 %v602
  %1186 = vmatprep.subr.mxu0 0.0
  %1187 = vmatpush1.msra.mxu0 %v601
  %1188 = vmatprep.subr.mxu0 0.0
  %1189 = vmatpush1.msra.mxu0 %v600
  %1190 = vmatprep.subr.mxu0 0.0
  %1191 = vmatpush2.msra.mxu0 0.0
  %1192 = vmatprep.subr.mxu0 0.0
  %1193 = vmatpush2.msra.mxu0 0.0
  %1194 = vmatprep.subr.mxu0 0.0
  %1195 = vmatpush2.msra.mxu0 0.0
  %1196 = vmatprep.subr.mxu0 0.0
  %1197 = vmatpush2.msra.mxu0 0.0
  %1198 = vmatprep.subr.mxu0 0.0
  %1199 = vmatpush2.msra.mxu0 0.0
  %1200 = vmatprep.subr.mxu0 0.0
  %1201 = vmatpush2.msra.mxu0 0.0
  %1202 = vmatprep.subr.mxu0 0.0
  %1203 = vmatpush2.msra.mxu0 0.0
  %1204 = vmatprep.subr.mxu0 0.0
  %1205 = vmatpush2.msra.mxu0 0.0
  %1206 = vmatprep.subr.mxu0 0.0
  %1207 = vmatpush2.msra.mxu0 0.0
  %1208 = vmatprep.subr.mxu0 0.0
  %1209 = vmatpush2.msra.mxu0 0.0
  %1210 = vmatprep.subr.mxu0 0.0
  %1211 = vmatpush2.msra.mxu0 0.0
  %1212 = vmatprep.subr.mxu0 0.0
  %1213 = vmatpush2.msra.mxu0 0.0
  %1214 = vmatprep.subr.mxu0 0.0
  %1215 = vmatpush2.msra.mxu0 0.0
  %1216 = vmatprep.subr.mxu0 0.0
  %1217 = vmatpush2.msra.mxu0 0.0
  %1218 = vmatprep.subr.mxu0 0.0
  %1219 = vmatpush2.msra.mxu0 0.0
  %1220 = vmatprep.subr.mxu0 0.0
  %1221 = vmatpush2.msra.mxu0 0.0
  %1222 = vmatprep.mubr.f32.mxu0 0.0
  %1223 = vmatmul.mubr.f32.gmra.mxu0 %v591
  %v1224 = vpop.f32.mrf.mxu0
  %v1225 = vadd.f32 %v621, %v1224
  %v1226 = vpop.f32.mrf.mxu0
  %1227 = vdwg.mxu0
  %v1228 = vmax.f32 %v1225, 0.0
  %1230 = vrot.lane.b32.xlu0 %v1228, 14
  %v1231 = vpop.permute.xlu0 %1230
  %vm1233 = vcmask 130160
  %1234 = vst.msk [vmem:[%s5] sm:$0xff] %vm1233, %v1231
  %1235 = vmatprep.subr.mxu0 0.0
  %1236 = vmatpush1.msra.mxu0 %v615
  %1237 = vmatprep.subr.mxu0 0.0
  %1238 = vmatpush1.msra.mxu0 %v614
  %1239 = vmatprep.subr.mxu0 0.0
  %1240 = vmatpush1.msra.mxu0 %v613
  %1241 = vmatprep.subr.mxu0 0.0
  %1242 = vmatpush1.msra.mxu0 %v612
  %1243 = vmatprep.subr.mxu0 0.0
  %1244 = vmatpush1.msra.mxu0 %v611
  %1245 = vmatprep.subr.mxu0 0.0
  %1246 = vmatpush1.msra.mxu0 %v610
  %1247 = vmatprep.subr.mxu0 0.0
  %1248 = vmatpush1.msra.mxu0 %v609
  %1249 = vmatprep.subr.mxu0 0.0
  %1250 = vmatpush1.msra.mxu0 %v608
  %1251 = vmatprep.subr.mxu0 0.0
  %1252 = vmatpush1.msra.mxu0 %v607
  %1253 = vmatprep.subr.mxu0 0.0
  %1254 = vmatpush1.msra.mxu0 %v606
  %1255 = vmatprep.subr.mxu0 0.0
  %1256 = vmatpush1.msra.mxu0 %v605
  %1257 = vmatprep.subr.mxu0 0.0
  %1258 = vmatpush1.msra.mxu0 %v604
  %1259 = vmatprep.subr.mxu0 0.0
  %1260 = vmatpush1.msra.mxu0 %v603
  %1261 = vmatprep.subr.mxu0 0.0
  %1262 = vmatpush1.msra.mxu0 %v602
  %1263 = vmatprep.subr.mxu0 0.0
  %1264 = vmatpush1.msra.mxu0 %v601
  %1265 = vmatprep.subr.mxu0 0.0
  %1266 = vmatpush1.msra.mxu0 %v600
  %1267 = vmatprep.subr.mxu0 0.0
  %1268 = vmatpush2.msra.mxu0 0.0
  %1269 = vmatprep.subr.mxu0 0.0
  %1270 = vmatpush2.msra.mxu0 0.0
  %1271 = vmatprep.subr.mxu0 0.0
  %1272 = vmatpush2.msra.mxu0 0.0
  %1273 = vmatprep.subr.mxu0 0.0
  %1274 = vmatpush2.msra.mxu0 0.0
  %1275 = vmatprep.subr.mxu0 0.0
  %1276 = vmatpush2.msra.mxu0 0.0
  %1277 = vmatprep.subr.mxu0 0.0
  %1278 = vmatpush2.msra.mxu0 0.0
  %1279 = vmatprep.subr.mxu0 0.0
  %1280 = vmatpush2.msra.mxu0 0.0
  %1281 = vmatprep.subr.mxu0 0.0
  %1282 = vmatpush2.msra.mxu0 0.0
  %1283 = vmatprep.subr.mxu0 0.0
  %1284 = vmatpush2.msra.mxu0 0.0
  %1285 = vmatprep.subr.mxu0 0.0
  %1286 = vmatpush2.msra.mxu0 0.0
  %1287 = vmatprep.subr.mxu0 0.0
  %1288 = vmatpush2.msra.mxu0 0.0
  %1289 = vmatprep.subr.mxu0 0.0
  %1290 = vmatpush2.msra.mxu0 0.0
  %1291 = vmatprep.subr.mxu0 0.0
  %1292 = vmatpush2.msra.mxu0 0.0
  %1293 = vmatprep.subr.mxu0 0.0
  %1294 = vmatpush2.msra.mxu0 0.0
  %1295 = vmatprep.subr.mxu0 0.0
  %1296 = vmatpush2.msra.mxu0 0.0
  %1297 = vmatprep.subr.mxu0 0.0
  %1298 = vmatpush2.msra.mxu0 0.0
  %1299 = vmatprep.mubr.f32.mxu0 0.0
  %1300 = vmatmul.mubr.f32.gmra.mxu0 %v592
  %v1301 = vpop.f32.mrf.mxu0
  %v1302 = vadd.f32 %v621, %v1301
  %v1303 = vpop.f32.mrf.mxu0
  %1304 = vdwg.mxu0
  %v1305 = vmax.f32 %v1302, 0.0
  %1307 = vrot.lane.b32.xlu0 %v1305, 16
  %v1308 = vpop.permute.xlu0 %1307
  %vm1310 = vcmask 146560
  %1311 = vst.msk [vmem:[%s5] sm:$0xff] %vm1310, %v1308
  %1312 = vmatprep.subr.mxu0 0.0
  %1313 = vmatpush1.msra.mxu0 %v615
  %1314 = vmatprep.subr.mxu0 0.0
  %1315 = vmatpush1.msra.mxu0 %v614
  %1316 = vmatprep.subr.mxu0 0.0
  %1317 = vmatpush1.msra.mxu0 %v613
  %1318 = vmatprep.subr.mxu0 0.0
  %1319 = vmatpush1.msra.mxu0 %v612
  %1320 = vmatprep.subr.mxu0 0.0
  %1321 = vmatpush1.msra.mxu0 %v611
  %1322 = vmatprep.subr.mxu0 0.0
  %1323 = vmatpush1.msra.mxu0 %v610
  %1324 = vmatprep.subr.mxu0 0.0
  %1325 = vmatpush1.msra.mxu0 %v609
  %1326 = vmatprep.subr.mxu0 0.0
  %1327 = vmatpush1.msra.mxu0 %v608
  %1328 = vmatprep.subr.mxu0 0.0
  %1329 = vmatpush1.msra.mxu0 %v607
  %1330 = vmatprep.subr.mxu0 0.0
  %1331 = vmatpush1.msra.mxu0 %v606
  %1332 = vmatprep.subr.mxu0 0.0
  %1333 = vmatpush1.msra.mxu0 %v605
  %1334 = vmatprep.subr.mxu0 0.0
  %1335 = vmatpush1.msra.mxu0 %v604
  %1336 = vmatprep.subr.mxu0 0.0
  %1337 = vmatpush1.msra.mxu0 %v603
  %1338 = vmatprep.subr.mxu0 0.0
  %1339 = vmatpush1.msra.mxu0 %v602
  %1340 = vmatprep.subr.mxu0 0.0
  %1341 = vmatpush1.msra.mxu0 %v601
  %1342 = vmatprep.subr.mxu0 0.0
  %1343 = vmatpush1.msra.mxu0 %v600
  %1344 = vmatprep.subr.mxu0 0.0
  %1345 = vmatpush2.msra.mxu0 0.0
  %1346 = vmatprep.subr.mxu0 0.0
  %1347 = vmatpush2.msra.mxu0 0.0
  %1348 = vmatprep.subr.mxu0 0.0
  %1349 = vmatpush2.msra.mxu0 0.0
  %1350 = vmatprep.subr.mxu0 0.0
  %1351 = vmatpush2.msra.mxu0 0.0
  %1352 = vmatprep.subr.mxu0 0.0
  %1353 = vmatpush2.msra.mxu0 0.0
  %1354 = vmatprep.subr.mxu0 0.0
  %1355 = vmatpush2.msra.mxu0 0.0
  %1356 = vmatprep.subr.mxu0 0.0
  %1357 = vmatpush2.msra.mxu0 0.0
  %1358 = vmatprep.subr.mxu0 0.0
  %1359 = vmatpush2.msra.mxu0 0.0
  %1360 = vmatprep.subr.mxu0 0.0
  %1361 = vmatpush2.msra.mxu0 0.0
  %1362 = vmatprep.subr.mxu0 0.0
  %1363 = vmatpush2.msra.mxu0 0.0
  %1364 = vmatprep.subr.mxu0 0.0
  %1365 = vmatpush2.msra.mxu0 0.0
  %1366 = vmatprep.subr.mxu0 0.0
  %1367 = vmatpush2.msra.mxu0 0.0
  %1368 = vmatprep.subr.mxu0 0.0
  %1369 = vmatpush2.msra.mxu0 0.0
  %1370 = vmatprep.subr.mxu0 0.0
  %1371 = vmatpush2.msra.mxu0 0.0
  %1372 = vmatprep.subr.mxu0 0.0
  %1373 = vmatpush2.msra.mxu0 0.0
  %1374 = vmatprep.subr.mxu0 0.0
  %1375 = vmatpush2.msra.mxu0 0.0
  %1376 = vmatprep.mubr.f32.mxu0 0.0
  %1377 = vmatmul.mubr.f32.gmra.mxu0 %v593
  %v1378 = vpop.f32.mrf.mxu0
  %v1379 = vadd.f32 %v621, %v1378
  %v1380 = vpop.f32.mrf.mxu0
  %1381 = vdwg.mxu0
  %v1382 = vmax.f32 %v1379, 0.0
  %1384 = vrot.lane.b32.xlu0 %v1382, 18
  %v1385 = vpop.permute.xlu0 %1384
  %vm1387 = vcmask 162960
  %1388 = vst.msk [vmem:[%s5] sm:$0xff] %vm1387, %v1385
  %1389 = vmatprep.subr.mxu0 0.0
  %1390 = vmatpush1.msra.mxu0 %v615
  %1391 = vmatprep.subr.mxu0 0.0
  %1392 = vmatpush1.msra.mxu0 %v614
  %1393 = vmatprep.subr.mxu0 0.0
  %1394 = vmatpush1.msra.mxu0 %v613
  %1395 = vmatprep.subr.mxu0 0.0
  %1396 = vmatpush1.msra.mxu0 %v612
  %1397 = vmatprep.subr.mxu0 0.0
  %1398 = vmatpush1.msra.mxu0 %v611
  %1399 = vmatprep.subr.mxu0 0.0
  %1400 = vmatpush1.msra.mxu0 %v610
  %1401 = vmatprep.subr.mxu0 0.0
  %1402 = vmatpush1.msra.mxu0 %v609
  %1403 = vmatprep.subr.mxu0 0.0
  %1404 = vmatpush1.msra.mxu0 %v608
  %1405 = vmatprep.subr.mxu0 0.0
  %1406 = vmatpush1.msra.mxu0 %v607
  %1407 = vmatprep.subr.mxu0 0.0
  %1408 = vmatpush1.msra.mxu0 %v606
  %1409 = vmatprep.subr.mxu0 0.0
  %1410 = vmatpush1.msra.mxu0 %v605
  %1411 = vmatprep.subr.mxu0 0.0
  %1412 = vmatpush1.msra.mxu0 %v604
  %1413 = vmatprep.subr.mxu0 0.0
  %1414 = vmatpush1.msra.mxu0 %v603
  %1415 = vmatprep.subr.mxu0 0.0
  %1416 = vmatpush1.msra.mxu0 %v602
  %1417 = vmatprep.subr.mxu0 0.0
  %1418 = vmatpush1.msra.mxu0 %v601
  %1419 = vmatprep.subr.mxu0 0.0
  %1420 = vmatpush1.msra.mxu0 %v600
  %1421 = vmatprep.subr.mxu0 0.0
  %1422 = vmatpush2.msra.mxu0 0.0
  %1423 = vmatprep.subr.mxu0 0.0
  %1424 = vmatpush2.msra.mxu0 0.0
  %1425 = vmatprep.subr.mxu0 0.0
  %1426 = vmatpush2.msra.mxu0 0.0
  %1427 = vmatprep.subr.mxu0 0.0
  %1428 = vmatpush2.msra.mxu0 0.0
  %1429 = vmatprep.subr.mxu0 0.0
  %1430 = vmatpush2.msra.mxu0 0.0
  %1431 = vmatprep.subr.mxu0 0.0
  %1432 = vmatpush2.msra.mxu0 0.0
  %1433 = vmatprep.subr.mxu0 0.0
  %1434 = vmatpush2.msra.mxu0 0.0
  %1435 = vmatprep.subr.mxu0 0.0
  %1436 = vmatpush2.msra.mxu0 0.0
  %1437 = vmatprep.subr.mxu0 0.0
  %1438 = vmatpush2.msra.mxu0 0.0
  %1439 = vmatprep.subr.mxu0 0.0
  %1440 = vmatpush2.msra.mxu0 0.0
  %1441 = vmatprep.subr.mxu0 0.0
  %1442 = vmatpush2.msra.mxu0 0.0
  %1443 = vmatprep.subr.mxu0 0.0
  %1444 = vmatpush2.msra.mxu0 0.0
  %1445 = vmatprep.subr.mxu0 0.0
  %1446 = vmatpush2.msra.mxu0 0.0
  %1447 = vmatprep.subr.mxu0 0.0
  %1448 = vmatpush2.msra.mxu0 0.0
  %1449 = vmatprep.subr.mxu0 0.0
  %1450 = vmatpush2.msra.mxu0 0.0
  %1451 = vmatprep.subr.mxu0 0.0
  %1452 = vmatpush2.msra.mxu0 0.0
  %1453 = vmatprep.mubr.f32.mxu0 0.0
  %1454 = vmatmul.mubr.f32.gmra.mxu0 %v594
  %v1455 = vpop.f32.mrf.mxu0
  %v1456 = vadd.f32 %v621, %v1455
  %v1457 = vpop.f32.mrf.mxu0
  %1458 = vdwg.mxu0
  %v1459 = vmax.f32 %v1456, 0.0
  %1461 = vrot.lane.b32.xlu0 %v1459, 20
  %v1462 = vpop.permute.xlu0 %1461
  %vm1464 = vcmask 179360
  %1465 = vst.msk [vmem:[%s5] sm:$0xff] %vm1464, %v1462
  %1466 = vmatprep.subr.mxu0 0.0
  %1467 = vmatpush1.msra.mxu0 %v615
  %1468 = vmatprep.subr.mxu0 0.0
  %1469 = vmatpush1.msra.mxu0 %v614
  %1470 = vmatprep.subr.mxu0 0.0
  %1471 = vmatpush1.msra.mxu0 %v613
  %1472 = vmatprep.subr.mxu0 0.0
  %1473 = vmatpush1.msra.mxu0 %v612
  %1474 = vmatprep.subr.mxu0 0.0
  %1475 = vmatpush1.msra.mxu0 %v611
  %1476 = vmatprep.subr.mxu0 0.0
  %1477 = vmatpush1.msra.mxu0 %v610
  %1478 = vmatprep.subr.mxu0 0.0
  %1479 = vmatpush1.msra.mxu0 %v609
  %1480 = vmatprep.subr.mxu0 0.0
  %1481 = vmatpush1.msra.mxu0 %v608
  %1482 = vmatprep.subr.mxu0 0.0
  %1483 = vmatpush1.msra.mxu0 %v607
  %1484 = vmatprep.subr.mxu0 0.0
  %1485 = vmatpush1.msra.mxu0 %v606
  %1486 = vmatprep.subr.mxu0 0.0
  %1487 = vmatpush1.msra.mxu0 %v605
  %1488 = vmatprep.subr.mxu0 0.0
  %1489 = vmatpush1.msra.mxu0 %v604
  %1490 = vmatprep.subr.mxu0 0.0
  %1491 = vmatpush1.msra.mxu0 %v603
  %1492 = vmatprep.subr.mxu0 0.0
  %1493 = vmatpush1.msra.mxu0 %v602
  %1494 = vmatprep.subr.mxu0 0.0
  %1495 = vmatpush1.msra.mxu0 %v601
  %1496 = vmatprep.subr.mxu0 0.0
  %1497 = vmatpush1.msra.mxu0 %v600
  %1498 = vmatprep.subr.mxu0 0.0
  %1499 = vmatpush2.msra.mxu0 0.0
  %1500 = vmatprep.subr.mxu0 0.0
  %1501 = vmatpush2.msra.mxu0 0.0
  %1502 = vmatprep.subr.mxu0 0.0
  %1503 = vmatpush2.msra.mxu0 0.0
  %1504 = vmatprep.subr.mxu0 0.0
  %1505 = vmatpush2.msra.mxu0 0.0
  %1506 = vmatprep.subr.mxu0 0.0
  %1507 = vmatpush2.msra.mxu0 0.0
  %1508 = vmatprep.subr.mxu0 0.0
  %1509 = vmatpush2.msra.mxu0 0.0
  %1510 = vmatprep.subr.mxu0 0.0
  %1511 = vmatpush2.msra.mxu0 0.0
  %1512 = vmatprep.subr.mxu0 0.0
  %1513 = vmatpush2.msra.mxu0 0.0
  %1514 = vmatprep.subr.mxu0 0.0
  %1515 = vmatpush2.msra.mxu0 0.0
  %1516 = vmatprep.subr.mxu0 0.0
  %1517 = vmatpush2.msra.mxu0 0.0
  %1518 = vmatprep.subr.mxu0 0.0
  %1519 = vmatpush2.msra.mxu0 0.0
  %1520 = vmatprep.subr.mxu0 0.0
  %1521 = vmatpush2.msra.mxu0 0.0
  %1522 = vmatprep.subr.mxu0 0.0
  %1523 = vmatpush2.msra.mxu0 0.0
  %1524 = vmatprep.subr.mxu0 0.0
  %1525 = vmatpush2.msra.mxu0 0.0
  %1526 = vmatprep.subr.mxu0 0.0
  %1527 = vmatpush2.msra.mxu0 0.0
  %1528 = vmatprep.subr.mxu0 0.0
  %1529 = vmatpush2.msra.mxu0 0.0
  %1530 = vmatprep.mubr.f32.mxu0 0.0
  %1531 = vmatmul.mubr.f32.gmra.mxu0 %v595
  %v1532 = vpop.f32.mrf.mxu0
  %v1533 = vadd.f32 %v621, %v1532
  %v1534 = vpop.f32.mrf.mxu0
  %1535 = vdwg.mxu0
  %v1536 = vmax.f32 %v1533, 0.0
  %1538 = vrot.lane.b32.xlu0 %v1536, 22
  %v1539 = vpop.permute.xlu0 %1538
  %vm1541 = vcmask 195760
  %1542 = vst.msk [vmem:[%s5] sm:$0xff] %vm1541, %v1539
  %1543 = vmatprep.subr.mxu0 0.0
  %1544 = vmatpush1.msra.mxu0 %v615
  %1545 = vmatprep.subr.mxu0 0.0
  %1546 = vmatpush1.msra.mxu0 %v614
  %1547 = vmatprep.subr.mxu0 0.0
  %1548 = vmatpush1.msra.mxu0 %v613
  %1549 = vmatprep.subr.mxu0 0.0
  %1550 = vmatpush1.msra.mxu0 %v612
  %1551 = vmatprep.subr.mxu0 0.0
  %1552 = vmatpush1.msra.mxu0 %v611
  %1553 = vmatprep.subr.mxu0 0.0
  %1554 = vmatpush1.msra.mxu0 %v610
  %1555 = vmatprep.subr.mxu0 0.0
  %1556 = vmatpush1.msra.mxu0 %v609
  %1557 = vmatprep.subr.mxu0 0.0
  %1558 = vmatpush1.msra.mxu0 %v608
  %1559 = vmatprep.subr.mxu0 0.0
  %1560 = vmatpush1.msra.mxu0 %v607
  %1561 = vmatprep.subr.mxu0 0.0
  %1562 = vmatpush1.msra.mxu0 %v606
  %1563 = vmatprep.subr.mxu0 0.0
  %1564 = vmatpush1.msra.mxu0 %v605
  %1565 = vmatprep.subr.mxu0 0.0
  %1566 = vmatpush1.msra.mxu0 %v604
  %1567 = vmatprep.subr.mxu0 0.0
  %1568 = vmatpush1.msra.mxu0 %v603
  %1569 = vmatprep.subr.mxu0 0.0
  %1570 = vmatpush1.msra.mxu0 %v602
  %1571 = vmatprep.subr.mxu0 0.0
  %1572 = vmatpush1.msra.mxu0 %v601
  %1573 = vmatprep.subr.mxu0 0.0
  %1574 = vmatpush1.msra.mxu0 %v600
  %1575 = vmatprep.subr.mxu0 0.0
  %1576 = vmatpush2.msra.mxu0 0.0
  %1577 = vmatprep.subr.mxu0 0.0
  %1578 = vmatpush2.msra.mxu0 0.0
  %1579 = vmatprep.subr.mxu0 0.0
  %1580 = vmatpush2.msra.mxu0 0.0
  %1581 = vmatprep.subr.mxu0 0.0
  %1582 = vmatpush2.msra.mxu0 0.0
  %1583 = vmatprep.subr.mxu0 0.0
  %1584 = vmatpush2.msra.mxu0 0.0
  %1585 = vmatprep.subr.mxu0 0.0
  %1586 = vmatpush2.msra.mxu0 0.0
  %1587 = vmatprep.subr.mxu0 0.0
  %1588 = vmatpush2.msra.mxu0 0.0
  %1589 = vmatprep.subr.mxu0 0.0
  %1590 = vmatpush2.msra.mxu0 0.0
  %1591 = vmatprep.subr.mxu0 0.0
  %1592 = vmatpush2.msra.mxu0 0.0
  %1593 = vmatprep.subr.mxu0 0.0
  %1594 = vmatpush2.msra.mxu0 0.0
  %1595 = vmatprep.subr.mxu0 0.0
  %1596 = vmatpush2.msra.mxu0 0.0
  %1597 = vmatprep.subr.mxu0 0.0
  %1598 = vmatpush2.msra.mxu0 0.0
  %1599 = vmatprep.subr.mxu0 0.0
  %1600 = vmatpush2.msra.mxu0 0.0
  %1601 = vmatprep.subr.mxu0 0.0
  %1602 = vmatpush2.msra.mxu0 0.0
  %1603 = vmatprep.subr.mxu0 0.0
  %1604 = vmatpush2.msra.mxu0 0.0
  %1605 = vmatprep.subr.mxu0 0.0
  %1606 = vmatpush2.msra.mxu0 0.0
  %1607 = vmatprep.mubr.f32.mxu0 0.0
  %1608 = vmatmul.mubr.f32.gmra.mxu0 %v596
  %v1609 = vpop.f32.mrf.mxu0
  %v1610 = vadd.f32 %v621, %v1609
  %v1611 = vpop.f32.mrf.mxu0
  %1612 = vdwg.mxu0
  %v1613 = vmax.f32 %v1610, 0.0
  %1615 = vrot.lane.b32.xlu0 %v1613, 24
  %v1616 = vpop.permute.xlu0 %1615
  %vm1618 = vcmask 212160
  %1619 = vst.msk [vmem:[%s5] sm:$0xff] %vm1618, %v1616
  %1620 = vmatprep.subr.mxu0 0.0
  %1621 = vmatpush1.msra.mxu0 %v615
  %1622 = vmatprep.subr.mxu0 0.0
  %1623 = vmatpush1.msra.mxu0 %v614
  %1624 = vmatprep.subr.mxu0 0.0
  %1625 = vmatpush1.msra.mxu0 %v613
  %1626 = vmatprep.subr.mxu0 0.0
  %1627 = vmatpush1.msra.mxu0 %v612
  %1628 = vmatprep.subr.mxu0 0.0
  %1629 = vmatpush1.msra.mxu0 %v611
  %1630 = vmatprep.subr.mxu0 0.0
  %1631 = vmatpush1.msra.mxu0 %v610
  %1632 = vmatprep.subr.mxu0 0.0
  %1633 = vmatpush1.msra.mxu0 %v609
  %1634 = vmatprep.subr.mxu0 0.0
  %1635 = vmatpush1.msra.mxu0 %v608
  %1636 = vmatprep.subr.mxu0 0.0
  %1637 = vmatpush1.msra.mxu0 %v607
  %1638 = vmatprep.subr.mxu0 0.0
  %1639 = vmatpush1.msra.mxu0 %v606
  %1640 = vmatprep.subr.mxu0 0.0
  %1641 = vmatpush1.msra.mxu0 %v605
  %1642 = vmatprep.subr.mxu0 0.0
  %1643 = vmatpush1.msra.mxu0 %v604
  %1644 = vmatprep.subr.mxu0 0.0
  %1645 = vmatpush1.msra.mxu0 %v603
  %1646 = vmatprep.subr.mxu0 0.0
  %1647 = vmatpush1.msra.mxu0 %v602
  %1648 = vmatprep.subr.mxu0 0.0
  %1649 = vmatpush1.msra.mxu0 %v601
  %1650 = vmatprep.subr.mxu0 0.0
  %1651 = vmatpush1.msra.mxu0 %v600
  %1652 = vmatprep.subr.mxu0 0.0
  %1653 = vmatpush2.msra.mxu0 0.0
  %1654 = vmatprep.subr.mxu0 0.0
  %1655 = vmatpush2.msra.mxu0 0.0
  %1656 = vmatprep.subr.mxu0 0.0
  %1657 = vmatpush2.msra.mxu0 0.0
  %1658 = vmatprep.subr.mxu0 0.0
  %1659 = vmatpush2.msra.mxu0 0.0
  %1660 = vmatprep.subr.mxu0 0.0
  %1661 = vmatpush2.msra.mxu0 0.0
  %1662 = vmatprep.subr.mxu0 0.0
  %1663 = vmatpush2.msra.mxu0 0.0
  %1664 = vmatprep.subr.mxu0 0.0
  %1665 = vmatpush2.msra.mxu0 0.0
  %1666 = vmatprep.subr.mxu0 0.0
  %1667 = vmatpush2.msra.mxu0 0.0
  %1668 = vmatprep.subr.mxu0 0.0
  %1669 = vmatpush2.msra.mxu0 0.0
  %1670 = vmatprep.subr.mxu0 0.0
  %1671 = vmatpush2.msra.mxu0 0.0
  %1672 = vmatprep.subr.mxu0 0.0
  %1673 = vmatpush2.msra.mxu0 0.0
  %1674 = vmatprep.subr.mxu0 0.0
  %1675 = vmatpush2.msra.mxu0 0.0
  %1676 = vmatprep.subr.mxu0 0.0
  %1677 = vmatpush2.msra.mxu0 0.0
  %1678 = vmatprep.subr.mxu0 0.0
  %1679 = vmatpush2.msra.mxu0 0.0
  %1680 = vmatprep.subr.mxu0 0.0
  %1681 = vmatpush2.msra.mxu0 0.0
  %1682 = vmatprep.subr.mxu0 0.0
  %1683 = vmatpush2.msra.mxu0 0.0
  %1684 = vmatprep.mubr.f32.mxu0 0.0
  %1685 = vmatmul.mubr.f32.gmra.mxu0 %v597
  %v1686 = vpop.f32.mrf.mxu0
  %v1687 = vadd.f32 %v621, %v1686
  %v1688 = vpop.f32.mrf.mxu0
  %1689 = vdwg.mxu0
  %v1690 = vmax.f32 %v1687, 0.0
  %1692 = vrot.lane.b32.xlu0 %v1690, 26
  %v1693 = vpop.permute.xlu0 %1692
  %vm1695 = vcmask 228560
  %1696 = vst.msk [vmem:[%s5] sm:$0xff] %vm1695, %v1693
  %1697 = vmatprep.subr.mxu0 0.0
  %1698 = vmatpush1.msra.mxu0 %v615
  %1699 = vmatprep.subr.mxu0 0.0
  %1700 = vmatpush1.msra.mxu0 %v614
  %1701 = vmatprep.subr.mxu0 0.0
  %1702 = vmatpush1.msra.mxu0 %v613
  %1703 = vmatprep.subr.mxu0 0.0
  %1704 = vmatpush1.msra.mxu0 %v612
  %1705 = vmatprep.subr.mxu0 0.0
  %1706 = vmatpush1.msra.mxu0 %v611
  %1707 = vmatprep.subr.mxu0 0.0
  %1708 = vmatpush1.msra.mxu0 %v610
  %1709 = vmatprep.subr.mxu0 0.0
  %1710 = vmatpush1.msra.mxu0 %v609
  %1711 = vmatprep.subr.mxu0 0.0
  %1712 = vmatpush1.msra.mxu0 %v608
  %1713 = vmatprep.subr.mxu0 0.0
  %1714 = vmatpush1.msra.mxu0 %v607
  %1715 = vmatprep.subr.mxu0 0.0
  %1716 = vmatpush1.msra.mxu0 %v606
  %1717 = vmatprep.subr.mxu0 0.0
  %1718 = vmatpush1.msra.mxu0 %v605
  %1719 = vmatprep.subr.mxu0 0.0
  %1720 = vmatpush1.msra.mxu0 %v604
  %1721 = vmatprep.subr.mxu0 0.0
  %1722 = vmatpush1.msra.mxu0 %v603
  %1723 = vmatprep.subr.mxu0 0.0
  %1724 = vmatpush1.msra.mxu0 %v602
  %1725 = vmatprep.subr.mxu0 0.0
  %1726 = vmatpush1.msra.mxu0 %v601
  %1727 = vmatprep.subr.mxu0 0.0
  %1728 = vmatpush1.msra.mxu0 %v600
  %1729 = vmatprep.subr.mxu0 0.0
  %1730 = vmatpush2.msra.mxu0 0.0
  %1731 = vmatprep.subr.mxu0 0.0
  %1732 = vmatpush2.msra.mxu0 0.0
  %1733 = vmatprep.subr.mxu0 0.0
  %1734 = vmatpush2.msra.mxu0 0.0
  %1735 = vmatprep.subr.mxu0 0.0
  %1736 = vmatpush2.msra.mxu0 0.0
  %1737 = vmatprep.subr.mxu0 0.0
  %1738 = vmatpush2.msra.mxu0 0.0
  %1739 = vmatprep.subr.mxu0 0.0
  %1740 = vmatpush2.msra.mxu0 0.0
  %1741 = vmatprep.subr.mxu0 0.0
  %1742 = vmatpush2.msra.mxu0 0.0
  %1743 = vmatprep.subr.mxu0 0.0
  %1744 = vmatpush2.msra.mxu0 0.0
  %1745 = vmatprep.subr.mxu0 0.0
  %1746 = vmatpush2.msra.mxu0 0.0
  %1747 = vmatprep.subr.mxu0 0.0
  %1748 = vmatpush2.msra.mxu0 0.0
  %1749 = vmatprep.subr.mxu0 0.0
  %1750 = vmatpush2.msra.mxu0 0.0
  %1751 = vmatprep.subr.mxu0 0.0
  %1752 = vmatpush2.msra.mxu0 0.0
  %1753 = vmatprep.subr.mxu0 0.0
  %1754 = vmatpush2.msra.mxu0 0.0
  %1755 = vmatprep.subr.mxu0 0.0
  %1756 = vmatpush2.msra.mxu0 0.0
  %1757 = vmatprep.subr.mxu0 0.0
  %1758 = vmatpush2.msra.mxu0 0.0
  %1759 = vmatprep.subr.mxu0 0.0
  %1760 = vmatpush2.msra.mxu0 0.0
  %1761 = vmatprep.mubr.f32.mxu0 0.0
  %1762 = vmatmul.mubr.f32.gmra.mxu0 %v598
  %v1763 = vpop.f32.mrf.mxu0
  %v1764 = vadd.f32 %v621, %v1763
  %v1765 = vpop.f32.mrf.mxu0
  %1766 = vdwg.mxu0
  %v1767 = vmax.f32 %v1764, 0.0
  %1769 = vrot.lane.b32.xlu0 %v1767, 28
  %v1770 = vpop.permute.xlu0 %1769
  %vm1772 = vcmask 244960
  %1773 = vst.msk [vmem:[%s5] sm:$0xff] %vm1772, %v1770
  %1774 = vmatprep.subr.mxu0 0.0
  %1775 = vmatpush1.msra.mxu0 %v615
  %1776 = vmatprep.subr.mxu0 0.0
  %1777 = vmatpush1.msra.mxu0 %v614
  %1778 = vmatprep.subr.mxu0 0.0
  %1779 = vmatpush1.msra.mxu0 %v613
  %1780 = vmatprep.subr.mxu0 0.0
  %1781 = vmatpush1.msra.mxu0 %v612
  %1782 = vmatprep.subr.mxu0 0.0
  %1783 = vmatpush1.msra.mxu0 %v611
  %1784 = vmatprep.subr.mxu0 0.0
  %1785 = vmatpush1.msra.mxu0 %v610
  %1786 = vmatprep.subr.mxu0 0.0
  %1787 = vmatpush1.msra.mxu0 %v609
  %1788 = vmatprep.subr.mxu0 0.0
  %1789 = vmatpush1.msra.mxu0 %v608
  %1790 = vmatprep.subr.mxu0 0.0
  %1791 = vmatpush1.msra.mxu0 %v607
  %1792 = vmatprep.subr.mxu0 0.0
  %1793 = vmatpush1.msra.mxu0 %v606
  %1794 = vmatprep.subr.mxu0 0.0
  %1795 = vmatpush1.msra.mxu0 %v605
  %1796 = vmatprep.subr.mxu0 0.0
  %1797 = vmatpush1.msra.mxu0 %v604
  %1798 = vmatprep.subr.mxu0 0.0
  %1799 = vmatpush1.msra.mxu0 %v603
  %1800 = vmatprep.subr.mxu0 0.0
  %1801 = vmatpush1.msra.mxu0 %v602
  %1802 = vmatprep.subr.mxu0 0.0
  %1803 = vmatpush1.msra.mxu0 %v601
  %1804 = vmatprep.subr.mxu0 0.0
  %1805 = vmatpush1.msra.mxu0 %v600
  %1806 = vmatprep.subr.mxu0 0.0
  %1807 = vmatpush2.msra.mxu0 0.0
  %1808 = vmatprep.subr.mxu0 0.0
  %1809 = vmatpush2.msra.mxu0 0.0
  %1810 = vmatprep.subr.mxu0 0.0
  %1811 = vmatpush2.msra.mxu0 0.0
  %1812 = vmatprep.subr.mxu0 0.0
  %1813 = vmatpush2.msra.mxu0 0.0
  %1814 = vmatprep.subr.mxu0 0.0
  %1815 = vmatpush2.msra.mxu0 0.0
  %1816 = vmatprep.subr.mxu0 0.0
  %1817 = vmatpush2.msra.mxu0 0.0
  %1818 = vmatprep.subr.mxu0 0.0
  %1819 = vmatpush2.msra.mxu0 0.0
  %1820 = vmatprep.subr.mxu0 0.0
  %1821 = vmatpush2.msra.mxu0 0.0
  %1822 = vmatprep.subr.mxu0 0.0
  %1823 = vmatpush2.msra.mxu0 0.0
  %1824 = vmatprep.subr.mxu0 0.0
  %1825 = vmatpush2.msra.mxu0 0.0
  %1826 = vmatprep.subr.mxu0 0.0
  %1827 = vmatpush2.msra.mxu0 0.0
  %1828 = vmatprep.subr.mxu0 0.0
  %1829 = vmatpush2.msra.mxu0 0.0
  %1830 = vmatprep.subr.mxu0 0.0
  %1831 = vmatpush2.msra.mxu0 0.0
  %1832 = vmatprep.subr.mxu0 0.0
  %1833 = vmatpush2.msra.mxu0 0.0
  %1834 = vmatprep.subr.mxu0 0.0
  %1835 = vmatpush2.msra.mxu0 0.0
  %1836 = vmatprep.subr.mxu0 0.0
  %1837 = vmatpush2.msra.mxu0 0.0
  %1838 = vmatprep.mubr.f32.mxu0 0.0
  %1839 = vmatmul.mubr.f32.gmra.mxu0 %v599
  %v1840 = vpop.f32.mrf.mxu0
  %v1841 = vadd.f32 %v621, %v1840
  %v1842 = vpop.f32.mrf.mxu0
  %1843 = vdwg.mxu0
  %v1844 = vmax.f32 %v1841, 0.0
  %1846 = vrot.lane.b32.xlu0 %v1844, 30
  %v1847 = vpop.permute.xlu0 %1846
  %vm1849 = vcmask 261360
  %1850 = vst.msk [vmem:[%s5] sm:$0xff] %vm1849, %v1847
  // Predicated region
  $region22: #{model_forward.1} parent=0 // pred_check
    _
  $region23: #{model_forward.1} parent=0 // pred_check_branch
    %1852 = sbr.rel (0) target = $region25
  $region24: #{model_forward.1} parent=0 // pred_region
    _
  $region25: #{model_forward.1} parent=0 // pred_fallthru
    _
  // Predicated region
  $region26: #{model_forward.1} parent=0 // pred_check
    _
  $region27: #{model_forward.1} parent=0 // pred_check_branch
    %1854 = sbr.rel (0) target = $region29
  $region28: #{model_forward.1} parent=0 // pred_region
    _
  $region29: #{model_forward.1} parent=0 // pred_fallthru
    _

</llo_original>
